<compile_context>
chip_gen: v6e
topology: v6e:2x2x1
jax: 0.10.0
libtpu: 0.0.40
codegen_flags: <defaults>
</compile_context>

<pallas_src>
import jax
import jax.numpy as jnp
from jax.experimental import pallas as pl
from jax.experimental.pallas import tpu as pltpu

NEG_INF = -1e30   # finite "masked logit": exp() underflows to 0, no inf-inf NaNs


def _round_up(x, m):
    return ((x + m - 1) // m) * m


def attention_kernel(dec_ref, enc_ref, wg_ref, bg_ref, wod_ref, woa_ref, bo_ref,
                     out_ref, m_sc, l_sc, acc_sc):
    """Grid = (batch_tiles, seq_tiles).  Online softmax over the seq axis.

    Block shapes:
      dec_ref  (TB, Hp)        decoder rows for this batch tile
      enc_ref  (TB, bs, Hp)    encoder tile streamed over the seq axis
      wg_ref   (Hp, Spad)      VMEM-resident (constant index_map)
      bg_ref   (1, Spad)       VMEM-resident; padded tail holds NEG_INF
      wod_ref  (Hp, Hp)        decoder half of the output projection (resident)
      woa_ref  (Hp, Hp)        attention-vector half (resident)
      bo_ref   (1, Hp)         resident
      out_ref  (TB, Hp)        lane-dense output slab
    """
    s = pl.program_id(1)
    ns = pl.num_programs(1)
    bs = enc_ref.shape[1]

    @pl.when(s == 0)
    def _init():
        m_sc[...] = jnp.full_like(m_sc, NEG_INF)
        l_sc[...] = jnp.zeros_like(l_sc)
        acc_sc[...] = jnp.zeros_like(acc_sc)

    dec = dec_ref[...]                                            # (TB, Hp)

    # Logits for this seq tile on the MXU: (TB, Hp) @ (Hp, bs) -> (TB, bs).
    # Wg/bg are VMEM-resident; this slice is a cheap intra-VMEM copy, not a DMA.
    start = pl.multiple_of(s * bs, bs)
    wg_tile = wg_ref[:, pl.ds(start, bs)]                         # (Hp, bs)
    bg_tile = bg_ref[:, pl.ds(start, bs)]                         # (1, bs)
    logits = jnp.dot(dec, wg_tile,
                     preferred_element_type=jnp.float32) + bg_tile

    # Online-softmax update (running max / denominator / weighted sum), f32.
    m_prev = m_sc[...]                                            # (TB, 1)
    m_new = jnp.maximum(m_prev, jnp.max(logits, axis=1, keepdims=True))
    alpha = jnp.exp(m_prev - m_new)                               # (TB, 1)
    p = jnp.exp(logits - m_new)                                   # (TB, bs)

    l_sc[...] = alpha * l_sc[...] + jnp.sum(p, axis=1, keepdims=True)
    # Attention-weighted encoder sum.  HBM-bound kernel -> the VPU/XLU
    # broadcast-multiply + sublane reduce is as good as an M=1 MXU contraction.
    weighted = jnp.sum(enc_ref[...] * p[:, :, None], axis=1)      # (TB, Hp) f32
    acc_sc[...] = alpha * acc_sc[...] + weighted
    m_sc[...] = m_new

    @pl.when(s == ns - 1)
    def _finalize():
        attn_vec = acc_sc[...] / l_sc[...]                        # exact divide
        # out = tanh(dec @ Wo_dec + attv @ Wo_att + bo)   (concat eliminated)
        out = (jnp.dot(dec, wod_ref[...], preferred_element_type=jnp.float32)
               + jnp.dot(attn_vec.astype(woa_ref.dtype), woa_ref[...],
                         preferred_element_type=jnp.float32)
               + bo_ref[...])
        out_ref[...] = jnp.tanh(out).astype(out_ref.dtype)


def attention_forward(encoder_output, decoder_output, wg, bg, wo, bo,
                      *, block_b=None, block_s=None, stream_dtype=None):
    """encoder_output: (B, S, H); decoder_output: (B, 1, H).
       wg: (H, max_len) [PyTorch weight.T], bg: (max_len,),
       wo: (2H, H)      [PyTorch weight.T], bo: (H,)."""
    B, S, H = encoder_output.shape
    max_len = wg.shape[1]
    assert max_len == S, "module semantics require max_len == enc_seq_len"

    out_dtype = encoder_output.dtype
    if stream_dtype is not None:
        # Halve HBM traffic for the big operands; softmax / accum stay f32.
        encoder_output = encoder_output.astype(stream_dtype)
        decoder_output = decoder_output.astype(stream_dtype)
        wg = wg.astype(stream_dtype)
        wo = wo.astype(stream_dtype)

    # ---- lane-dense feature dim --------------------------------------------
    Hp = _round_up(H, 128)

    # ---- batch / seq tiling --------------------------------------------------
    itemsize = jnp.dtype(encoder_output.dtype).itemsize
    if block_b is not None:
        TB = _round_up(block_b, 8)
    else:
        TB = min(_round_up(B, 8), 64)
    if block_s is not None:
        bs = _round_up(block_s, 128)
    else:
        # Target ~4 MiB encoder DMAs: big enough to run near the HBM roofline
        # on v5e/v6e/v7x, small enough that 2x(tile) + resident weights fit the
        # 16/32 MiB scoped-VMEM defaults.
        target_bytes = 4 * 1024 * 1024
        bs_cap = max(128, (target_bytes // (TB * Hp * itemsize)) // 128 * 128)
        bs = min(_round_up(S, 128), bs_cap)
    Bp = _round_up(B, TB)
    Spad = _round_up(S, bs)
    ns = Spad // bs

    # ---- pad operands (zero rows/cols; masked logits get NEG_INF bias) -------
    enc_p = jnp.pad(encoder_output, ((0, Bp - B), (0, Spad - S), (0, Hp - H)))
    dec_p = jnp.pad(decoder_output.reshape(B, H), ((0, Bp - B), (0, Hp - H)))
    wg_p = jnp.pad(wg, ((0, Hp - H), (0, Spad - S)))
    bg_p = jnp.pad(bg.reshape(1, S).astype(jnp.float32),
                   ((0, 0), (0, Spad - S)), constant_values=NEG_INF)
    wo_dec = jnp.pad(wo[:H, :], ((0, Hp - H), (0, Hp - H)))
    wo_att = jnp.pad(wo[H:, :], ((0, Hp - H), (0, Hp - H)))
    bo_p = jnp.pad(bo.reshape(1, H).astype(jnp.float32), ((0, 0), (0, Hp - H)))

    out = pl.pallas_call(
        attention_kernel,
        out_shape=jax.ShapeDtypeStruct((Bp, Hp), out_dtype),
        grid_spec=pltpu.PrefetchScalarGridSpec(
            num_scalar_prefetch=0,
            grid=(Bp // TB, ns),
            in_specs=[
                pl.BlockSpec((TB, Hp), lambda b, s: (b, 0)),         # decoder
                pl.BlockSpec((TB, bs, Hp), lambda b, s: (b, s, 0)),  # encoder tile
                pl.BlockSpec((Hp, Spad), lambda b, s: (0, 0)),       # Wg (resident)
                pl.BlockSpec((1, Spad), lambda b, s: (0, 0)),        # bg (resident)
                pl.BlockSpec((Hp, Hp), lambda b, s: (0, 0)),         # Wo_dec
                pl.BlockSpec((Hp, Hp), lambda b, s: (0, 0)),         # Wo_att
                pl.BlockSpec((1, Hp), lambda b, s: (0, 0)),          # bo
            ],
            out_specs=pl.BlockSpec((TB, Hp), lambda b, s: (b, 0)),
            scratch_shapes=[
                pltpu.VMEM((TB, 1), jnp.float32),    # running max
                pltpu.VMEM((TB, 1), jnp.float32),    # running denominator
                pltpu.VMEM((TB, Hp), jnp.float32),   # running weighted sum
            ],
        ),
        compiler_params=pltpu.CompilerParams(
            dimension_semantics=("parallel", "arbitrary"),
        ),
    )(dec_p, enc_p, wg_p, bg_p, wo_dec, wo_att, bo_p)

    return out[:B, :H].reshape(B, 1, H)


def reference_forward(encoder_output, decoder_output, wg, bg, wo, bo):
    B, S, H = encoder_output.shape
    dec = decoder_output.reshape(B, H)
    logits = dec @ wg + bg
    att = jax.nn.softmax(logits, axis=1)
    attn_vec = jnp.sum(encoder_output * att[:, :, None], axis=1)
    concat = jnp.concatenate([dec, attn_vec], axis=1)
    return jnp.tanh(concat @ wo + bo).reshape(B, 1, H)


def _make_inputs(key, B, S, H):
    k_enc, k_dec, k_wg, k_wo = jax.random.split(key, 4)
    encoder_output = jax.random.normal(k_enc, (B, S, H), dtype=jnp.float32)
    decoder_output = jax.random.normal(k_dec, (B, 1, H), dtype=jnp.float32)
    # nn.init.uniform_(weight, -0.1, 0.1); bias = 0.  Stored transposed: (in, out).
    wg = jax.random.uniform(k_wg, (H, S), minval=-0.1, maxval=0.1,
                            dtype=jnp.float32)
    bg = jnp.zeros((S,), dtype=jnp.float32)
    wo = jax.random.uniform(k_wo, (2 * H, H), minval=-0.1, maxval=0.1,
                            dtype=jnp.float32)
    bo = jnp.zeros((H,), dtype=jnp.float32)
    return encoder_output, decoder_output, wg, bg, wo, bo


if __name__ == "__main__":
    key = jax.random.PRNGKey(0)
    k1, k2 = jax.random.split(key)

    # Case 1: module-scale shapes (B=2, seq=max_len=8, hidden=32).
    enc, dec, wg, bg, wo, bo = _make_inputs(k1, B=2, S=8, H=32)
    out = attention_forward(enc, dec, wg, bg, wo, bo)
    out = jax.block_until_ready(out)
    ref = reference_forward(enc, dec, wg, bg, wo, bo)
    assert out.shape == (2, 1, 32)
    assert jnp.allclose(out, ref, atol=1e-4, rtol=1e-4), \
        f"case1 max err {jnp.max(jnp.abs(out - ref))}"

    # Case 2: exercises multi-tile online softmax + tail/batch/feature padding.
    enc, dec, wg, bg, wo, bo = _make_inputs(k2, B=3, S=200, H=20)
    out = attention_forward(enc, dec, wg, bg, wo, bo, block_b=8, block_s=128)
    out = jax.block_until_ready(out)
    ref = reference_forward(enc, dec, wg, bg, wo, bo)
    assert out.shape == (3, 1, 20)
    assert jnp.allclose(out, ref, atol=1e-4, rtol=1e-4), \
        f"case2 max err {jnp.max(jnp.abs(out - ref))}"

    print("KERNEL_OK")
</pallas_src>

<mosaic_0001>
module attributes {stable_mosaic.version = 11 : i64} {
  func.func @attention_kernel(%arg0: i32, %arg1: i32, %arg2: memref<8x128xf32, #tpu.memory_space<vmem>>, %arg3: memref<8x128x128xf32, #tpu.memory_space<vmem>>, %arg4: memref<128x128xf32, #tpu.memory_space<vmem>>, %arg5: memref<1x128xf32, #tpu.memory_space<vmem>>, %arg6: memref<128x128xf32, #tpu.memory_space<vmem>>, %arg7: memref<128x128xf32, #tpu.memory_space<vmem>>, %arg8: memref<1x128xf32, #tpu.memory_space<vmem>>, %arg9: memref<8x128xf32, #tpu.memory_space<vmem>>, %arg10: memref<8x1xf32, #tpu.memory_space<vmem>>, %arg11: memref<8x1xf32, #tpu.memory_space<vmem>>, %arg12: memref<8x128xf32, #tpu.memory_space<vmem>>) attributes {dimension_semantics = [#tpu.dimension_semantics<parallel>, #tpu.dimension_semantics<arbitrary>], iteration_bounds = array<i64: 1, 1>, scalar_prefetch = 0 : i64, scratch_operands = 3 : i64, tpu.core_type = #tpu.core_type<tc>, window_params = [{transform_indices = @transform_0, window_bounds = array<i64: 8, 128>}, {transform_indices = @transform_1, window_bounds = array<i64: 8, 128, 128>}, {pipeline_mode = #tpu.pipeline_mode<synchronous>, transform_indices = @transform_2, window_bounds = array<i64: 128, 128>}, {pipeline_mode = #tpu.pipeline_mode<synchronous>, transform_indices = @transform_3, window_bounds = array<i64: 1, 128>}, {pipeline_mode = #tpu.pipeline_mode<synchronous>, transform_indices = @transform_4, window_bounds = array<i64: 128, 128>}, {pipeline_mode = #tpu.pipeline_mode<synchronous>, transform_indices = @transform_5, window_bounds = array<i64: 128, 128>}, {pipeline_mode = #tpu.pipeline_mode<synchronous>, transform_indices = @transform_6, window_bounds = array<i64: 1, 128>}, {transform_indices = @transform_7, window_bounds = array<i64: 8, 128>}]} {
    %c0_i32 = arith.constant 0 : i32
    %0 = arith.cmpi eq, %arg1, %c0_i32 : i32
    %1 = arith.extui %0 : i1 to i32
    %c0_i32_0 = arith.constant 0 : i32
    %2 = arith.cmpi ne, %1, %c0_i32_0 : i32
    scf.if %2 {
      %cst_24 = arith.constant -1.000000e+30 : f32
      %42 = vector.broadcast %cst_24 : f32 to vector<8x1xf32>
      %c0_25 = arith.constant 0 : index
      %c0_26 = arith.constant 0 : index
      %43 = vector.load %arg10[%c0_25, %c0_26] : memref<8x1xf32, #tpu.memory_space<vmem>>, vector<8x1xf32>
      tpu.vector_store %arg10[%c0_25, %c0_26], %42 {strides = array<i32>} : memref<8x1xf32, #tpu.memory_space<vmem>>, vector<8x1xf32>,
      %cst_27 = arith.constant 0.000000e+00 : f32
      %44 = vector.broadcast %cst_27 : f32 to vector<8x1xf32>
      %c0_28 = arith.constant 0 : index
      %c0_29 = arith.constant 0 : index
      %45 = vector.load %arg11[%c0_28, %c0_29] : memref<8x1xf32, #tpu.memory_space<vmem>>, vector<8x1xf32>
      tpu.vector_store %arg11[%c0_28, %c0_29], %44 {strides = array<i32>} : memref<8x1xf32, #tpu.memory_space<vmem>>, vector<8x1xf32>,
      %cst_30 = arith.constant 0.000000e+00 : f32
      %46 = vector.broadcast %cst_30 : f32 to vector<8x128xf32>
      %c0_31 = arith.constant 0 : index
      %c0_32 = arith.constant 0 : index
      %47 = vector.load %arg12[%c0_31, %c0_32] : memref<8x128xf32, #tpu.memory_space<vmem>>, vector<8x128xf32>
      tpu.vector_store %arg12[%c0_31, %c0_32], %46 {strides = array<i32>} : memref<8x128xf32, #tpu.memory_space<vmem>>, vector<8x128xf32>,
    } else {
    }
    %c0 = arith.constant 0 : index
    %c0_1 = arith.constant 0 : index
    %3 = vector.load %arg2[%c0, %c0_1] : memref<8x128xf32, #tpu.memory_space<vmem>>, vector<8x128xf32>
    %c128_i32 = arith.constant 128 : i32
    %4 = arith.muli %arg1, %c128_i32 : i32
    %5 = tpu.assume_multiple %4, 128 : i32
    %c0_2 = arith.constant 0 : index
    %6 = arith.index_cast %5 : i32 to index
    %7 = vector.load %arg4[%c0_2, %6] : memref<128x128xf32, #tpu.memory_space<vmem>>, vector<128x128xf32>
    %c0_3 = arith.constant 0 : index
    %8 = arith.index_cast %5 : i32 to index
    %9 = vector.load %arg5[%c0_3, %8] : memref<1x128xf32, #tpu.memory_space<vmem>>, vector<1x128xf32>
    %cst = arith.constant dense<0.000000e+00> : vector<8x128xf32>
    %10 = tpu.matmul %3, %7, %cst {dimension_numbers = #tpu.dot_dimension_numbers<[1], [0], [0], [1], [0, 0, 1, 1], [], []>} : vector<8x128xf32>, vector<128x128xf32>, vector<8x128xf32> -> vector<8x128xf32>
    %11 = vector.broadcast %9 : vector<1x128xf32> to vector<8x128xf32>
    %12 = arith.addf %10, %11 : vector<8x128xf32>
    %c0_4 = arith.constant 0 : index
    %c0_5 = arith.constant 0 : index
    %13 = vector.load %arg10[%c0_4, %c0_5] : memref<8x1xf32, #tpu.memory_space<vmem>>, vector<8x1xf32>
    %cst_6 = arith.constant dense<0xFF800000> : vector<8xf32>
    %14 = vector.multi_reduction <maximumf>, %12, %cst_6 [1] : vector<8x128xf32> to vector<8xf32>
    %15 = vector.shape_cast %14 : vector<8xf32> to vector<8x1xf32>
    %16 = arith.maximumf %13, %15 : vector<8x1xf32>
    %17 = arith.subf %13, %16 : vector<8x1xf32>
    %18 = math.exp %17 : vector<8x1xf32>
    %19 = vector.broadcast %16 : vector<8x1xf32> to vector<8x128xf32>
    %20 = arith.subf %12, %19 : vector<8x128xf32>
    %21 = math.exp %20 : vector<8x128xf32>
    %c0_7 = arith.constant 0 : index
    %c0_8 = arith.constant 0 : index
    %22 = vector.load %arg11[%c0_7, %c0_8] : memref<8x1xf32, #tpu.memory_space<vmem>>, vector<8x1xf32>
    %23 = arith.mulf %18, %22 : vector<8x1xf32>
    %cst_9 = arith.constant dense<0.000000e+00> : vector<8xf32>
    %24 = vector.multi_reduction <add>, %21, %cst_9 [1] : vector<8x128xf32> to vector<8xf32>
    %25 = vector.shape_cast %24 : vector<8xf32> to vector<8x1xf32>
    %26 = arith.addf %23, %25 : vector<8x1xf32>
    %c0_10 = arith.constant 0 : index
    %c0_11 = arith.constant 0 : index
    %27 = vector.load %arg11[%c0_10, %c0_11] : memref<8x1xf32, #tpu.memory_space<vmem>>, vector<8x1xf32>
    tpu.vector_store %arg11[%c0_10, %c0_11], %26 {strides = array<i32>} : memref<8x1xf32, #tpu.memory_space<vmem>>, vector<8x1xf32>,
    %c0_12 = arith.constant 0 : index
    %c0_13 = arith.constant 0 : index
    %c0_14 = arith.constant 0 : index
    %28 = vector.load %arg3[%c0_12, %c0_13, %c0_14] : memref<8x128x128xf32, #tpu.memory_space<vmem>>, vector<8x128x128xf32>
    %29 = vector.shape_cast %21 : vector<8x128xf32> to vector<8x128x1xf32>
    %30 = vector.broadcast %29 : vector<8x128x1xf32> to vector<8x128x128xf32>
    %31 = arith.mulf %28, %30 : vector<8x128x128xf32>
    %cst_15 = arith.constant dense<0.000000e+00> : vector<8x128xf32>
    %32 = vector.multi_reduction <add>, %31, %cst_15 [1] : vector<8x128x128xf32> to vector<8x128xf32>
    %c0_16 = arith.constant 0 : index
    %c0_17 = arith.constant 0 : index
    %33 = vector.load %arg12[%c0_16, %c0_17] : memref<8x128xf32, #tpu.memory_space<vmem>>, vector<8x128xf32>
    %34 = vector.broadcast %18 : vector<8x1xf32> to vector<8x128xf32>
    %35 = arith.mulf %34, %33 : vector<8x128xf32>
    %36 = arith.addf %35, %32 : vector<8x128xf32>
    %c0_18 = arith.constant 0 : index
    %c0_19 = arith.constant 0 : index
    %37 = vector.load %arg12[%c0_18, %c0_19] : memref<8x128xf32, #tpu.memory_space<vmem>>, vector<8x128xf32>
    tpu.vector_store %arg12[%c0_18, %c0_19], %36 {strides = array<i32>} : memref<8x128xf32, #tpu.memory_space<vmem>>, vector<8x128xf32>,
    %c0_20 = arith.constant 0 : index
    %c0_21 = arith.constant 0 : index
    %38 = vector.load %arg10[%c0_20, %c0_21] : memref<8x1xf32, #tpu.memory_space<vmem>>, vector<8x1xf32>
    tpu.vector_store %arg10[%c0_20, %c0_21], %16 {strides = array<i32>} : memref<8x1xf32, #tpu.memory_space<vmem>>, vector<8x1xf32>,
    %c0_i32_22 = arith.constant 0 : i32
    %39 = arith.cmpi eq, %arg1, %c0_i32_22 : i32
    %40 = arith.extui %39 : i1 to i32
    %c0_i32_23 = arith.constant 0 : i32
    %41 = arith.cmpi ne, %40, %c0_i32_23 : i32
    scf.if %41 {
      %c0_24 = arith.constant 0 : index
      %c0_25 = arith.constant 0 : index
      %42 = vector.load %arg12[%c0_24, %c0_25] : memref<8x128xf32, #tpu.memory_space<vmem>>, vector<8x128xf32>
      %c0_26 = arith.constant 0 : index
      %c0_27 = arith.constant 0 : index
      %43 = vector.load %arg11[%c0_26, %c0_27] : memref<8x1xf32, #tpu.memory_space<vmem>>, vector<8x1xf32>
      %44 = vector.broadcast %43 : vector<8x1xf32> to vector<8x128xf32>
      %45 = arith.divf %42, %44 : vector<8x128xf32>
      %c0_28 = arith.constant 0 : index
      %c0_29 = arith.constant 0 : index
      %46 = vector.load %arg6[%c0_28, %c0_29] : memref<128x128xf32, #tpu.memory_space<vmem>>, vector<128x128xf32>
      %cst_30 = arith.constant dense<0.000000e+00> : vector<8x128xf32>
      %47 = tpu.matmul %3, %46, %cst_30 {dimension_numbers = #tpu.dot_dimension_numbers<[1], [0], [0], [1], [0, 0, 1, 1], [], []>} : vector<8x128xf32>, vector<128x128xf32>, vector<8x128xf32> -> vector<8x128xf32>
      %c0_31 = arith.constant 0 : index
      %c0_32 = arith.constant 0 : index
      %48 = vector.load %arg7[%c0_31, %c0_32] : memref<128x128xf32, #tpu.memory_space<vmem>>, vector<128x128xf32>
      %cst_33 = arith.constant dense<0.000000e+00> : vector<8x128xf32>
      %49 = tpu.matmul %45, %48, %cst_33 {dimension_numbers = #tpu.dot_dimension_numbers<[1], [0], [0], [1], [0, 0, 1, 1], [], []>} : vector<8x128xf32>, vector<128x128xf32>, vector<8x128xf32> -> vector<8x128xf32>
      %50 = arith.addf %47, %49 : vector<8x128xf32>
      %c0_34 = arith.constant 0 : index
      %c0_35 = arith.constant 0 : index
      %51 = vector.load %arg8[%c0_34, %c0_35] : memref<1x128xf32, #tpu.memory_space<vmem>>, vector<1x128xf32>
      %52 = vector.broadcast %51 : vector<1x128xf32> to vector<8x128xf32>
      %53 = arith.addf %50, %52 : vector<8x128xf32>
      %54 = math.tanh %53 : vector<8x128xf32>
      %c0_36 = arith.constant 0 : index
      %c0_37 = arith.constant 0 : index
      %55 = vector.load %arg9[%c0_36, %c0_37] : memref<8x128xf32, #tpu.memory_space<vmem>>, vector<8x128xf32>
      tpu.vector_store %arg9[%c0_36, %c0_37], %54 {strides = array<i32>} : memref<8x128xf32, #tpu.memory_space<vmem>>, vector<8x128xf32>,
    } else {
    }
    return
  }
  func.func @transform_0(%arg0: i32, %arg1: i32) -> (i32, i32) {
    %c0_i32 = arith.constant 0 : i32
    %c0_i32_0 = arith.constant 0 : i32
    return %arg0, %c0_i32 : i32, i32
  }
  func.func @transform_1(%arg0: i32, %arg1: i32) -> (i32, i32, i32) {
    %c0_i32 = arith.constant 0 : i32
    %c0_i32_0 = arith.constant 0 : i32
    return %arg0, %arg1, %c0_i32 : i32, i32, i32
  }
  func.func @transform_2(%arg0: i32, %arg1: i32) -> (i32, i32) {
    %c0_i32 = arith.constant 0 : i32
    %c0_i32_0 = arith.constant 0 : i32
    %c0_i32_1 = arith.constant 0 : i32
    return %c0_i32, %c0_i32_0 : i32, i32
  }
  func.func @transform_3(%arg0: i32, %arg1: i32) -> (i32, i32) {
    %c0_i32 = arith.constant 0 : i32
    %c0_i32_0 = arith.constant 0 : i32
    %c0_i32_1 = arith.constant 0 : i32
    return %c0_i32, %c0_i32_0 : i32, i32
  }
  func.func @transform_4(%arg0: i32, %arg1: i32) -> (i32, i32) {
    %c0_i32 = arith.constant 0 : i32
    %c0_i32_0 = arith.constant 0 : i32
    %c0_i32_1 = arith.constant 0 : i32
    return %c0_i32, %c0_i32_0 : i32, i32
  }
  func.func @transform_5(%arg0: i32, %arg1: i32) -> (i32, i32) {
    %c0_i32 = arith.constant 0 : i32
    %c0_i32_0 = arith.constant 0 : i32
    %c0_i32_1 = arith.constant 0 : i32
    return %c0_i32, %c0_i32_0 : i32, i32
  }
  func.func @transform_6(%arg0: i32, %arg1: i32) -> (i32, i32) {
    %c0_i32 = arith.constant 0 : i32
    %c0_i32_0 = arith.constant 0 : i32
    %c0_i32_1 = arith.constant 0 : i32
    return %c0_i32, %c0_i32_0 : i32, i32
  }
  func.func @transform_7(%arg0: i32, %arg1: i32) -> (i32, i32) {
    %c0_i32 = arith.constant 0 : i32
    %c0_i32_0 = arith.constant 0 : i32
    return %arg0, %c0_i32 : i32, i32
  }
}

</mosaic_0001>

<llo_original>
// kernel: tpu_custom_call.1
$region0: #{tpu_custom_call.1}
  #allocation0 [shape = 'u32[]', space=smem, size = 0x4, offset = 0x4, fixed_abs, tag = 'smem constant byte address 0x4 - core index']
  #allocation1 [shape = 'u32[144,128]{1,0:T(1,128)}', space=vmem, size = 0x12000, scoped, tag = 'internal scratch']
  #allocation2 [shape = 'f32[8,1]{1,0:T(8,128)}', space=vmem, size = 0x1000, scoped, tag = 'scratch operand']
  #allocation3 [shape = 'f32[8,1]{1,0:T(8,128)}', space=vmem, size = 0x1000, scoped, tag = 'scratch operand']
  #allocation4 [shape = 'f32[8,128]{1,0:T(8,128)}', space=vmem, size = 0x1000, scoped, tag = 'scratch operand']
  %s0 = inlined_call_operand.hbm [shape: f32[8,128], index: 0, kind: input, shape index: {}]
  %s1 = inlined_call_operand.hbm [shape: f32[8,128,128], index: 1, kind: input, shape index: {}]
  %s2 = inlined_call_operand.hbm [shape: f32[128,128], index: 2, kind: input, shape index: {}]
  %s3 = inlined_call_operand.vmem [shape: f32[1,128], index: 3, kind: input, shape index: {}]
  %s4 = inlined_call_operand.hbm [shape: f32[128,128], index: 4, kind: input, shape index: {}]
  %s5 = inlined_call_operand.hbm [shape: f32[128,128], index: 5, kind: input, shape index: {}]
  %s6 = inlined_call_operand.vmem [shape: f32[1,128], index: 6, kind: input, shape index: {}]
  %s7 = inlined_call_operand.hbm [shape: f32[8,128], index: 7, kind: output, shape index: {}]
  %s8 = sld [smem:[#allocation0]]
  $region66: #{tpu_custom_call.1} parent=0
    _
  %s10 = ssub.s32 1, %s8
  %s11 = scalar_select 0, %s10, %s8
  $region1: #{tpu_custom_call.1} parent=0
    #allocation5 [shape = 'u8[4096]{0}', space=vmem, size = 0x1000, scoped, tag = 'input window, operand 0, single buffered']
    #allocation6 [shape = 's32[1]{0}', space=sflag, size = 0x4, scoped, tag = 'scoped memory for tpu_custom_call.1']
    #allocation7 [shape = 's32[1]{0}', space=sflag, size = 0x4, scoped, tag = 'scoped memory for tpu_custom_call.1']
    #allocation8 [shape = 'u8[524288]{0}', space=vmem, size = 0x80000, scoped, tag = 'input window, operand 1, single buffered']
    #allocation9 [shape = 's32[1]{0}', space=sflag, size = 0x4, scoped, tag = 'scoped memory for tpu_custom_call.1']
    #allocation10 [shape = 'u8[65536]{0}', space=vmem, size = 0x10000, scoped, tag = 'input window, operand 2, single buffered']
    #allocation11 [shape = 'u8[65536]{0}', space=vmem, size = 0x10000, scoped, tag = 'input window, operand 4, single buffered']
    #allocation12 [shape = 's32[1]{0}', space=sflag, size = 0x4, scoped, tag = 'scoped memory for tpu_custom_call.1']
    #allocation13 [shape = 'u8[65536]{0}', space=vmem, size = 0x10000, scoped, tag = 'input window, operand 5, single buffered']
    #allocation14 [shape = 'u8[4096]{0}', space=vmem, size = 0x1000, scoped, tag = 'output window, operand 0, single buffered']
    %12 = vsyncpa [#allocation6], 0
    %13 = vsyncpa [#allocation9], 0
    %14 = vsyncpa [#allocation12], 0
    %15 = vsyncpa [#allocation7], 0
    // Predicated region
    $region2: #{tpu_custom_call.1} parent=1 // pred_check
      _
    $region3: #{tpu_custom_call.1} parent=1 // pred_check_branch
      %17 = sbr.rel (0) target = $region5
    $region4: #{tpu_custom_call.1} parent=1 // pred_region
      %s19 = ssub.s32 128, 128
      %20 = vsyncadd [#allocation6], %s19
      %s22 = sshll.u32 [#allocation5], 4
      %s23 = int_to_ptr.vmem [resolvable:$true] %s22
      %25 = dma.hbm_to_vmem [thread:$0]  %s0, 128, %s23, [#allocation6]
    $region5: #{tpu_custom_call.1} parent=1 // pred_fallthru
      _
    // Predicated region
    $region6: #{tpu_custom_call.1} parent=1 // pred_check
      _
    $region7: #{tpu_custom_call.1} parent=1 // pred_check_branch
      %27 = sbr.rel (0) target = $region9
    $region8: #{tpu_custom_call.1} parent=1 // pred_region
      %s29 = ssub.s32 16384, 16384
      %30 = vsyncadd [#allocation9], %s29
      %s31 = sshll.u32 [#allocation8], 4
      %s32 = int_to_ptr.vmem [resolvable:$true] %s31
      %37 = dma.hbm_to_vmem [thread:$0]  %s1, 16384, %s32, [#allocation9], 128, 128, 8
    $region9: #{tpu_custom_call.1} parent=1 // pred_fallthru
      _
    // Predicated region
    $region10: #{tpu_custom_call.1} parent=1 // pred_check
      _
    $region11: #{tpu_custom_call.1} parent=1 // pred_check_branch
      %39 = sbr.rel (0) target = $region13
    $region12: #{tpu_custom_call.1} parent=1 // pred_region
      %s41 = ssub.s32 2048, 2048
      %42 = vsyncadd [#allocation9], %s41
      %s43 = sshll.u32 [#allocation10], 4
      %s44 = int_to_ptr.vmem [resolvable:$true] %s43
      %49 = dma.hbm_to_vmem [thread:$0]  %s2, 2048, %s44, [#allocation9], 128, 128, 8
    $region13: #{tpu_custom_call.1} parent=1 // pred_fallthru
      _
    // Predicated region
    $region14: #{tpu_custom_call.1} parent=1 // pred_check
      _
    $region15: #{tpu_custom_call.1} parent=1 // pred_check_branch
      %51 = sbr.rel (0) target = $region17
    $region16: #{tpu_custom_call.1} parent=1 // pred_region
      _
    $region17: #{tpu_custom_call.1} parent=1 // pred_fallthru
      _
    // Predicated region
    $region18: #{tpu_custom_call.1} parent=1 // pred_check
      _
    $region19: #{tpu_custom_call.1} parent=1 // pred_check_branch
      %53 = sbr.rel (0) target = $region21
    $region20: #{tpu_custom_call.1} parent=1 // pred_region
      %s55 = ssub.s32 2048, 2048
      %56 = vsyncadd [#allocation12], %s55
      %s57 = sshll.u32 [#allocation11], 4
      %s58 = int_to_ptr.vmem [resolvable:$true] %s57
      %63 = dma.hbm_to_vmem [thread:$0]  %s4, 2048, %s58, [#allocation12], 128, 128, 8
    $region21: #{tpu_custom_call.1} parent=1 // pred_fallthru
      _
    // Predicated region
    $region22: #{tpu_custom_call.1} parent=1 // pred_check
      _
    $region23: #{tpu_custom_call.1} parent=1 // pred_check_branch
      %65 = sbr.rel (0) target = $region25
    $region24: #{tpu_custom_call.1} parent=1 // pred_region
      %s67 = ssub.s32 2048, 2048
      %68 = vsyncadd [#allocation12], %s67
      %s69 = sshll.u32 [#allocation13], 4
      %s70 = int_to_ptr.vmem [resolvable:$true] %s69
      %75 = dma.hbm_to_vmem [thread:$0]  %s5, 2048, %s70, [#allocation12], 128, 128, 8
    $region25: #{tpu_custom_call.1} parent=1 // pred_fallthru
      _
    // Predicated region
    $region26: #{tpu_custom_call.1} parent=1 // pred_check
      _
    $region27: #{tpu_custom_call.1} parent=1 // pred_check_branch
      %77 = sbr.rel (0) target = $region29
    $region28: #{tpu_custom_call.1} parent=1 // pred_region
      _
    $region29: #{tpu_custom_call.1} parent=1 // pred_fallthru
      _
    // Predicated region
    $region30: #{tpu_custom_call.1} parent=1 // pred_check
      _
    $region31: #{tpu_custom_call.1} parent=1 // pred_check_branch
      %79 = sbr.rel (0) target = $region33
    $region32: #{tpu_custom_call.1} parent=1 // pred_region
      %80 = dma.done [#allocation6], 128
    $region33: #{tpu_custom_call.1} parent=1 // pred_fallthru
      _
    // Predicated region
    $region34: #{tpu_custom_call.1} parent=1 // pred_check
      _
    $region35: #{tpu_custom_call.1} parent=1 // pred_check_branch
      %82 = sbr.rel (0) target = $region37
    $region36: #{tpu_custom_call.1} parent=1 // pred_region
      %83 = dma.done [#allocation9], 16384
    $region37: #{tpu_custom_call.1} parent=1 // pred_fallthru
      _
    // Predicated region
    $region38: #{tpu_custom_call.1} parent=1 // pred_check
      _
    $region39: #{tpu_custom_call.1} parent=1 // pred_check_branch
      %85 = sbr.rel (0) target = $region41
    $region40: #{tpu_custom_call.1} parent=1 // pred_region
      %86 = dma.done [#allocation9], 2048
    $region41: #{tpu_custom_call.1} parent=1 // pred_fallthru
      _
    // Predicated region
    $region42: #{tpu_custom_call.1} parent=1 // pred_check
      _
    $region43: #{tpu_custom_call.1} parent=1 // pred_check_branch
      %88 = sbr.rel (0) target = $region45
    $region44: #{tpu_custom_call.1} parent=1 // pred_region
      %89 = dma.done [#allocation12], 2048
    $region45: #{tpu_custom_call.1} parent=1 // pred_fallthru
      _
    // Predicated region
    $region46: #{tpu_custom_call.1} parent=1 // pred_check
      _
    $region47: #{tpu_custom_call.1} parent=1 // pred_check_branch
      %91 = sbr.rel (0) target = $region49
    $region48: #{tpu_custom_call.1} parent=1 // pred_region
      %92 = dma.done [#allocation12], 2048
    $region49: #{tpu_custom_call.1} parent=1 // pred_fallthru
      _
    %p93 = scmp.eq.s32.totalorder 0, 0
    // Predicated region
    $region50: #{tpu_custom_call.1} parent=1 // pred_check
      %p94 = pneg %p93
    $region51: #{tpu_custom_call.1} parent=1 // pred_check_branch
      %96 = sbr.rel (%p94) target = $region53
    $region52: #{tpu_custom_call.1} parent=1 // pred_region
      %vm97 = vcmask 7168
      %98 = vst.msk [vmem:[#allocation2] sm:$0xff] %vm97, -1e+30
      %99 = vst.msk [vmem:[#allocation3] sm:$0xff] %vm97, 0.0
      %100 = vst [vmem:[#allocation4] sm:$0xff] 0.0
    $region53: #{tpu_custom_call.1} parent=1 // pred_fallthru
      _
    %v101 = vld [vmem:[#allocation5] sm:$0xff]
    %s102 = smul.u32 0, 128
    %s103 = sshra.s32 %s102, 7
    %s104 = sand.u32 %s102, 127
    %s105 = scalar_lea.vmem [#allocation10], %s103
    %v106 = vld [vmem:[%s105] sm:$0xff]
    %v107 = vld [vmem:[%s105 + $0x8] sm:$0xff]
    %v108 = vld [vmem:[%s105 + $0x10] sm:$0xff]
    %v109 = vld [vmem:[%s105 + $0x18] sm:$0xff]
    %v110 = vld [vmem:[%s105 + $0x20] sm:$0xff]
    %v111 = vld [vmem:[%s105 + $0x28] sm:$0xff]
    %v112 = vld [vmem:[%s105 + $0x30] sm:$0xff]
    %v113 = vld [vmem:[%s105 + $0x38] sm:$0xff]
    %v114 = vld [vmem:[%s105 + $0x40] sm:$0xff]
    %v115 = vld [vmem:[%s105 + $0x48] sm:$0xff]
    %v116 = vld [vmem:[%s105 + $0x50] sm:$0xff]
    %v117 = vld [vmem:[%s105 + $0x58] sm:$0xff]
    %v118 = vld [vmem:[%s105 + $0x60] sm:$0xff]
    %v119 = vld [vmem:[%s105 + $0x68] sm:$0xff]
    %v120 = vld [vmem:[%s105 + $0x70] sm:$0xff]
    %v121 = vld [vmem:[%s105 + $0x78] sm:$0xff]
    %s122 = scalar_lea.vmem %s3, %s103
    %v123 = vld [vmem:[%s122] sm:$0x1]
    %v125 = vlaneseq
    %v126 = vshrl.u32 %v125, 7
    %v127 = vsub.s32 0, %v126
    %v128 = vrot.slane %v123, %v127
    %130 = vmatprep.subr.mxu0 0.0
    %131 = vmatpush1.msra.mxu0 %v121
    %132 = vmatprep.subr.mxu0 0.0
    %133 = vmatpush1.msra.mxu0 %v120
    %134 = vmatprep.subr.mxu0 0.0
    %135 = vmatpush1.msra.mxu0 %v119
    %136 = vmatprep.subr.mxu0 0.0
    %137 = vmatpush1.msra.mxu0 %v118
    %138 = vmatprep.subr.mxu0 0.0
    %139 = vmatpush1.msra.mxu0 %v117
    %140 = vmatprep.subr.mxu0 0.0
    %141 = vmatpush1.msra.mxu0 %v116
    %142 = vmatprep.subr.mxu0 0.0
    %143 = vmatpush1.msra.mxu0 %v115
    %144 = vmatprep.subr.mxu0 0.0
    %145 = vmatpush1.msra.mxu0 %v114
    %146 = vmatprep.subr.mxu0 0.0
    %147 = vmatpush1.msra.mxu0 %v113
    %148 = vmatprep.subr.mxu0 0.0
    %149 = vmatpush1.msra.mxu0 %v112
    %150 = vmatprep.subr.mxu0 0.0
    %151 = vmatpush1.msra.mxu0 %v111
    %152 = vmatprep.subr.mxu0 0.0
    %153 = vmatpush1.msra.mxu0 %v110
    %154 = vmatprep.subr.mxu0 0.0
    %155 = vmatpush1.msra.mxu0 %v109
    %156 = vmatprep.subr.mxu0 0.0
    %157 = vmatpush1.msra.mxu0 %v108
    %158 = vmatprep.subr.mxu0 0.0
    %159 = vmatpush1.msra.mxu0 %v107
    %160 = vmatprep.subr.mxu0 0.0
    %161 = vmatpush1.msra.mxu0 %v106
    %162 = vmatprep.subr.mxu0 0.0
    %163 = vmatpush2.msra.mxu0 0.0
    %164 = vmatprep.subr.mxu0 0.0
    %165 = vmatpush2.msra.mxu0 0.0
    %166 = vmatprep.subr.mxu0 0.0
    %167 = vmatpush2.msra.mxu0 0.0
    %168 = vmatprep.subr.mxu0 0.0
    %169 = vmatpush2.msra.mxu0 0.0
    %170 = vmatprep.subr.mxu0 0.0
    %171 = vmatpush2.msra.mxu0 0.0
    %172 = vmatprep.subr.mxu0 0.0
    %173 = vmatpush2.msra.mxu0 0.0
    %174 = vmatprep.subr.mxu0 0.0
    %175 = vmatpush2.msra.mxu0 0.0
    %176 = vmatprep.subr.mxu0 0.0
    %177 = vmatpush2.msra.mxu0 0.0
    %178 = vmatprep.subr.mxu0 0.0
    %179 = vmatpush2.msra.mxu0 0.0
    %180 = vmatprep.subr.mxu0 0.0
    %181 = vmatpush2.msra.mxu0 0.0
    %182 = vmatprep.subr.mxu0 0.0
    %183 = vmatpush2.msra.mxu0 0.0
    %184 = vmatprep.subr.mxu0 0.0
    %185 = vmatpush2.msra.mxu0 0.0
    %186 = vmatprep.subr.mxu0 0.0
    %187 = vmatpush2.msra.mxu0 0.0
    %188 = vmatprep.subr.mxu0 0.0
    %189 = vmatpush2.msra.mxu0 0.0
    %190 = vmatprep.subr.mxu0 0.0
    %191 = vmatpush2.msra.mxu0 0.0
    %192 = vmatprep.subr.mxu0 0.0
    %193 = vmatpush2.msra.mxu0 0.0
    %194 = vmatprep.mubr.f32.mxu0 0.0
    %195 = vmatmul.mubr.f32.gmra.mxu0 %v101
    %v196 = vpop.f32.mrf.mxu0
    %v197 = vadd.f32 %v128, %v196
    %v198 = vpop.f32.mrf.mxu0
    %199 = vdwg.mxu0
    %v200 = vld [vmem:[#allocation2] sm:$0xff]
    %201 = vmax.xlane.f32.xlu0 %v197
    %v202 = vpop.xlane.xlu0 %201
    %v203 = vmax.f32 %v200, %v202
    %v204 = vsub.f32 %v200, %v203
    %v205 = vmul.f32 %v204, 1.442695
    %v206 = vpow.pop %v205
    %208 = vset.pattern.permute.xlu0 0
    %209 = vperm.xlu0 %208, %v203
    %v210 = vpop.permute.xlu0 %209
    %v212 = vsub.f32 %v197, %v210
    %v213 = vmul.f32 %v212, 1.442695
    %v214 = vpow.pop %v213
    %v215 = vld [vmem:[#allocation3] sm:$0xff]
    %v216 = vmul.f32 %v206, %v215
    %217 = vadd.xlane.f32.xlu0 %v214
    %v218 = vpop.xlane.xlu0 %217
    %v219 = vadd.f32 %v216, %v218
    %vm220 = vcmask 7168
    %221 = vst.msk [vmem:[#allocation3] sm:$0xff] %vm220, %v219
    %v222 = vld [vmem:[#allocation8] sm:$0xff]
    %v223 = vld [vmem:[#allocation8 + $0x8] sm:$0xff]
    %v224 = vld [vmem:[#allocation8 + $0x10] sm:$0xff]
    %v225 = vld [vmem:[#allocation8 + $0x18] sm:$0xff]
    %v226 = vld [vmem:[#allocation8 + $0x20] sm:$0xff]
    %v227 = vld [vmem:[#allocation8 + $0x28] sm:$0xff]
    %v228 = vld [vmem:[#allocation8 + $0x30] sm:$0xff]
    %v229 = vld [vmem:[#allocation8 + $0x38] sm:$0xff]
    %v230 = vld [vmem:[#allocation8 + $0x40] sm:$0xff]
    %v231 = vld [vmem:[#allocation8 + $0x48] sm:$0xff]
    %v232 = vld [vmem:[#allocation8 + $0x50] sm:$0xff]
    %v233 = vld [vmem:[#allocation8 + $0x58] sm:$0xff]
    %v234 = vld [vmem:[#allocation8 + $0x60] sm:$0xff]
    %v235 = vld [vmem:[#allocation8 + $0x68] sm:$0xff]
    %v236 = vld [vmem:[#allocation8 + $0x70] sm:$0xff]
    %v237 = vld [vmem:[#allocation8 + $0x78] sm:$0xff]
    %v238 = vld [vmem:[#allocation8 + $0x80] sm:$0xff]
    %v239 = vld [vmem:[#allocation8 + $0x88] sm:$0xff]
    %v240 = vld [vmem:[#allocation8 + $0x90] sm:$0xff]
    %v241 = vld [vmem:[#allocation8 + $0x98] sm:$0xff]
    %v242 = vld [vmem:[#allocation8 + $0xa0] sm:$0xff]
    %v243 = vld [vmem:[#allocation8 + $0xa8] sm:$0xff]
    %v244 = vld [vmem:[#allocation8 + $0xb0] sm:$0xff]
    %v245 = vld [vmem:[#allocation8 + $0xb8] sm:$0xff]
    %v246 = vld [vmem:[#allocation8 + $0xc0] sm:$0xff]
    %v247 = vld [vmem:[#allocation8 + $0xc8] sm:$0xff]
    %v248 = vld [vmem:[#allocation8 + $0xd0] sm:$0xff]
    %v249 = vld [vmem:[#allocation8 + $0xd8] sm:$0xff]
    %v250 = vld [vmem:[#allocation8 + $0xe0] sm:$0xff]
    %v251 = vld [vmem:[#allocation8 + $0xe8] sm:$0xff]
    %v252 = vld [vmem:[#allocation8 + $0xf0] sm:$0xff]
    %v253 = vld [vmem:[#allocation8 + $0xf8] sm:$0xff]
    %v254 = vld [vmem:[#allocation8 + $0x100] sm:$0xff]
    %v255 = vld [vmem:[#allocation8 + $0x108] sm:$0xff]
    %v256 = vld [vmem:[#allocation8 + $0x110] sm:$0xff]
    %v257 = vld [vmem:[#allocation8 + $0x118] sm:$0xff]
    %v258 = vld [vmem:[#allocation8 + $0x120] sm:$0xff]
    %v259 = vld [vmem:[#allocation8 + $0x128] sm:$0xff]
    %v260 = vld [vmem:[#allocation8 + $0x130] sm:$0xff]
    %v261 = vld [vmem:[#allocation8 + $0x138] sm:$0xff]
    %v262 = vld [vmem:[#allocation8 + $0x140] sm:$0xff]
    %v263 = vld [vmem:[#allocation8 + $0x148] sm:$0xff]
    %v264 = vld [vmem:[#allocation8 + $0x150] sm:$0xff]
    %v265 = vld [vmem:[#allocation8 + $0x158] sm:$0xff]
    %v266 = vld [vmem:[#allocation8 + $0x160] sm:$0xff]
    %v267 = vld [vmem:[#allocation8 + $0x168] sm:$0xff]
    %v268 = vld [vmem:[#allocation8 + $0x170] sm:$0xff]
    %v269 = vld [vmem:[#allocation8 + $0x178] sm:$0xff]
    %v270 = vld [vmem:[#allocation8 + $0x180] sm:$0xff]
    %v271 = vld [vmem:[#allocation8 + $0x188] sm:$0xff]
    %v272 = vld [vmem:[#allocation8 + $0x190] sm:$0xff]
    %v273 = vld [vmem:[#allocation8 + $0x198] sm:$0xff]
    %v274 = vld [vmem:[#allocation8 + $0x1a0] sm:$0xff]
    %v275 = vld [vmem:[#allocation8 + $0x1a8] sm:$0xff]
    %v276 = vld [vmem:[#allocation8 + $0x1b0] sm:$0xff]
    %v277 = vld [vmem:[#allocation8 + $0x1b8] sm:$0xff]
    %v278 = vld [vmem:[#allocation8 + $0x1c0] sm:$0xff]
    %v279 = vld [vmem:[#allocation8 + $0x1c8] sm:$0xff]
    %v280 = vld [vmem:[#allocation8 + $0x1d0] sm:$0xff]
    %v281 = vld [vmem:[#allocation8 + $0x1d8] sm:$0xff]
    %v282 = vld [vmem:[#allocation8 + $0x1e0] sm:$0xff]
    %v283 = vld [vmem:[#allocation8 + $0x1e8] sm:$0xff]
    %v284 = vld [vmem:[#allocation8 + $0x1f0] sm:$0xff]
    %v285 = vld [vmem:[#allocation8 + $0x1f8] sm:$0xff]
    %v286 = vld [vmem:[#allocation8 + $0x200] sm:$0xff]
    %v287 = vld [vmem:[#allocation8 + $0x208] sm:$0xff]
    %v288 = vld [vmem:[#allocation8 + $0x210] sm:$0xff]
    %v289 = vld [vmem:[#allocation8 + $0x218] sm:$0xff]
    %v290 = vld [vmem:[#allocation8 + $0x220] sm:$0xff]
    %v291 = vld [vmem:[#allocation8 + $0x228] sm:$0xff]
    %v292 = vld [vmem:[#allocation8 + $0x230] sm:$0xff]
    %v293 = vld [vmem:[#allocation8 + $0x238] sm:$0xff]
    %v294 = vld [vmem:[#allocation8 + $0x240] sm:$0xff]
    %v295 = vld [vmem:[#allocation8 + $0x248] sm:$0xff]
    %v296 = vld [vmem:[#allocation8 + $0x250] sm:$0xff]
    %v297 = vld [vmem:[#allocation8 + $0x258] sm:$0xff]
    %v298 = vld [vmem:[#allocation8 + $0x260] sm:$0xff]
    %v299 = vld [vmem:[#allocation8 + $0x268] sm:$0xff]
    %v300 = vld [vmem:[#allocation8 + $0x270] sm:$0xff]
    %v301 = vld [vmem:[#allocation8 + $0x278] sm:$0xff]
    %v302 = vld [vmem:[#allocation8 + $0x280] sm:$0xff]
    %v303 = vld [vmem:[#allocation8 + $0x288] sm:$0xff]
    %v304 = vld [vmem:[#allocation8 + $0x290] sm:$0xff]
    %v305 = vld [vmem:[#allocation8 + $0x298] sm:$0xff]
    %v306 = vld [vmem:[#allocation8 + $0x2a0] sm:$0xff]
    %v307 = vld [vmem:[#allocation8 + $0x2a8] sm:$0xff]
    %v308 = vld [vmem:[#allocation8 + $0x2b0] sm:$0xff]
    %v309 = vld [vmem:[#allocation8 + $0x2b8] sm:$0xff]
    %v310 = vld [vmem:[#allocation8 + $0x2c0] sm:$0xff]
    %v311 = vld [vmem:[#allocation8 + $0x2c8] sm:$0xff]
    %v312 = vld [vmem:[#allocation8 + $0x2d0] sm:$0xff]
    %v313 = vld [vmem:[#allocation8 + $0x2d8] sm:$0xff]
    %v314 = vld [vmem:[#allocation8 + $0x2e0] sm:$0xff]
    %v315 = vld [vmem:[#allocation8 + $0x2e8] sm:$0xff]
    %v316 = vld [vmem:[#allocation8 + $0x2f0] sm:$0xff]
    %v317 = vld [vmem:[#allocation8 + $0x2f8] sm:$0xff]
    %v318 = vld [vmem:[#allocation8 + $0x300] sm:$0xff]
    %v319 = vld [vmem:[#allocation8 + $0x308] sm:$0xff]
    %v320 = vld [vmem:[#allocation8 + $0x310] sm:$0xff]
    %v321 = vld [vmem:[#allocation8 + $0x318] sm:$0xff]
    %v322 = vld [vmem:[#allocation8 + $0x320] sm:$0xff]
    %v323 = vld [vmem:[#allocation8 + $0x328] sm:$0xff]
    %v324 = vld [vmem:[#allocation8 + $0x330] sm:$0xff]
    %v325 = vld [vmem:[#allocation8 + $0x338] sm:$0xff]
    %v326 = vld [vmem:[#allocation8 + $0x340] sm:$0xff]
    %v327 = vld [vmem:[#allocation8 + $0x348] sm:$0xff]
    %v328 = vld [vmem:[#allocation8 + $0x350] sm:$0xff]
    %v329 = vld [vmem:[#allocation8 + $0x358] sm:$0xff]
    %v330 = vld [vmem:[#allocation8 + $0x360] sm:$0xff]
    %v331 = vld [vmem:[#allocation8 + $0x368] sm:$0xff]
    %v332 = vld [vmem:[#allocation8 + $0x370] sm:$0xff]
    %v333 = vld [vmem:[#allocation8 + $0x378] sm:$0xff]
    %v334 = vld [vmem:[#allocation8 + $0x380] sm:$0xff]
    %v335 = vld [vmem:[#allocation8 + $0x388] sm:$0xff]
    %v336 = vld [vmem:[#allocation8 + $0x390] sm:$0xff]
    %v337 = vld [vmem:[#allocation8 + $0x398] sm:$0xff]
    %v338 = vld [vmem:[#allocation8 + $0x3a0] sm:$0xff]
    %v339 = vld [vmem:[#allocation8 + $0x3a8] sm:$0xff]
    %v340 = vld [vmem:[#allocation8 + $0x3b0] sm:$0xff]
    %v341 = vld [vmem:[#allocation8 + $0x3b8] sm:$0xff]
    %v342 = vld [vmem:[#allocation8 + $0x3c0] sm:$0xff]
    %v343 = vld [vmem:[#allocation8 + $0x3c8] sm:$0xff]
    %v344 = vld [vmem:[#allocation8 + $0x3d0] sm:$0xff]
    %v345 = vld [vmem:[#allocation8 + $0x3d8] sm:$0xff]
    %v346 = vld [vmem:[#allocation8 + $0x3e0] sm:$0xff]
    %v347 = vld [vmem:[#allocation8 + $0x3e8] sm:$0xff]
    %v348 = vld [vmem:[#allocation8 + $0x3f0] sm:$0xff]
    %v349 = vld [vmem:[#allocation8 + $0x3f8] sm:$0xff]
    %v350 = vlaneseq
    %v351 = vshrl.u32 %v350, 7
    %v352 = vsub.s32 0, %v351
    %v353 = vrot.slane %v214, %v352
    %355 = vbcast.lane.b32.xlu0 %v353, 256
    %v356 = vpop.permute.xlu0 %355
    %s358 = sor.u32 256, 8
    %359 = vbcast.lane.b32.xlu0 %v353, %s358
    %v360 = vpop.permute.xlu0 %359
    %s362 = sor.u32 256, 16
    %363 = vbcast.lane.b32.xlu0 %v353, %s362
    %v364 = vpop.permute.xlu0 %363
    %s366 = sor.u32 256, 24
    %367 = vbcast.lane.b32.xlu0 %v353, %s366
    %v368 = vpop.permute.xlu0 %367
    %s370 = sor.u32 256, 32
    %371 = vbcast.lane.b32.xlu0 %v353, %s370
    %v372 = vpop.permute.xlu0 %371
    %s374 = sor.u32 256, 40
    %375 = vbcast.lane.b32.xlu0 %v353, %s374
    %v376 = vpop.permute.xlu0 %375
    %s378 = sor.u32 256, 48
    %379 = vbcast.lane.b32.xlu0 %v353, %s378
    %v380 = vpop.permute.xlu0 %379
    %s382 = sor.u32 256, 56
    %383 = vbcast.lane.b32.xlu0 %v353, %s382
    %v384 = vpop.permute.xlu0 %383
    %s386 = sor.u32 256, 64
    %387 = vbcast.lane.b32.xlu0 %v353, %s386
    %v388 = vpop.permute.xlu0 %387
    %s390 = sor.u32 256, 72
    %391 = vbcast.lane.b32.xlu0 %v353, %s390
    %v392 = vpop.permute.xlu0 %391
    %s394 = sor.u32 256, 80
    %395 = vbcast.lane.b32.xlu0 %v353, %s394
    %v396 = vpop.permute.xlu0 %395
    %s398 = sor.u32 256, 88
    %399 = vbcast.lane.b32.xlu0 %v353, %s398
    %v400 = vpop.permute.xlu0 %399
    %s402 = sor.u32 256, 96
    %403 = vbcast.lane.b32.xlu0 %v353, %s402
    %v404 = vpop.permute.xlu0 %403
    %s406 = sor.u32 256, 104
    %407 = vbcast.lane.b32.xlu0 %v353, %s406
    %v408 = vpop.permute.xlu0 %407
    %s410 = sor.u32 256, 112
    %411 = vbcast.lane.b32.xlu0 %v353, %s410
    %v412 = vpop.permute.xlu0 %411
    %s414 = sor.u32 256, 120
    %415 = vbcast.lane.b32.xlu0 %v353, %s414
    %v416 = vpop.permute.xlu0 %415
    %v417 = vlaneseq
    %v418 = vshrl.u32 %v417, 7
    %v419 = vsub.s32 1, %v418
    %v420 = vrot.slane %v214, %v419
    %422 = vbcast.lane.b32.xlu0 %v420, 256
    %v423 = vpop.permute.xlu0 %422
    %s425 = sor.u32 256, 8
    %426 = vbcast.lane.b32.xlu0 %v420, %s425
    %v427 = vpop.permute.xlu0 %426
    %s429 = sor.u32 256, 16
    %430 = vbcast.lane.b32.xlu0 %v420, %s429
    %v431 = vpop.permute.xlu0 %430
    %s433 = sor.u32 256, 24
    %434 = vbcast.lane.b32.xlu0 %v420, %s433
    %v435 = vpop.permute.xlu0 %434
    %s437 = sor.u32 256, 32
    %438 = vbcast.lane.b32.xlu0 %v420, %s437
    %v439 = vpop.permute.xlu0 %438
    %s441 = sor.u32 256, 40
    %442 = vbcast.lane.b32.xlu0 %v420, %s441
    %v443 = vpop.permute.xlu0 %442
    %s445 = sor.u32 256, 48
    %446 = vbcast.lane.b32.xlu0 %v420, %s445
    %v447 = vpop.permute.xlu0 %446
    %s449 = sor.u32 256, 56
    %450 = vbcast.lane.b32.xlu0 %v420, %s449
    %v451 = vpop.permute.xlu0 %450
    %s453 = sor.u32 256, 64
    %454 = vbcast.lane.b32.xlu0 %v420, %s453
    %v455 = vpop.permute.xlu0 %454
    %s457 = sor.u32 256, 72
    %458 = vbcast.lane.b32.xlu0 %v420, %s457
    %v459 = vpop.permute.xlu0 %458
    %s461 = sor.u32 256, 80
    %462 = vbcast.lane.b32.xlu0 %v420, %s461
    %v463 = vpop.permute.xlu0 %462
    %s465 = sor.u32 256, 88
    %466 = vbcast.lane.b32.xlu0 %v420, %s465
    %v467 = vpop.permute.xlu0 %466
    %s469 = sor.u32 256, 96
    %470 = vbcast.lane.b32.xlu0 %v420, %s469
    %v471 = vpop.permute.xlu0 %470
    %s473 = sor.u32 256, 104
    %474 = vbcast.lane.b32.xlu0 %v420, %s473
    %v475 = vpop.permute.xlu0 %474
    %s477 = sor.u32 256, 112
    %478 = vbcast.lane.b32.xlu0 %v420, %s477
    %v479 = vpop.permute.xlu0 %478
    %s481 = sor.u32 256, 120
    %482 = vbcast.lane.b32.xlu0 %v420, %s481
    %v483 = vpop.permute.xlu0 %482
    %v484 = vlaneseq
    %v485 = vshrl.u32 %v484, 7
    %v486 = vsub.s32 2, %v485
    %v487 = vrot.slane %v214, %v486
    %489 = vbcast.lane.b32.xlu0 %v487, 256
    %v490 = vpop.permute.xlu0 %489
    %s492 = sor.u32 256, 8
    %493 = vbcast.lane.b32.xlu0 %v487, %s492
    %v494 = vpop.permute.xlu0 %493
    %s496 = sor.u32 256, 16
    %497 = vbcast.lane.b32.xlu0 %v487, %s496
    %v498 = vpop.permute.xlu0 %497
    %s500 = sor.u32 256, 24
    %501 = vbcast.lane.b32.xlu0 %v487, %s500
    %v502 = vpop.permute.xlu0 %501
    %s504 = sor.u32 256, 32
    %505 = vbcast.lane.b32.xlu0 %v487, %s504
    %v506 = vpop.permute.xlu0 %505
    %s508 = sor.u32 256, 40
    %509 = vbcast.lane.b32.xlu0 %v487, %s508
    %v510 = vpop.permute.xlu0 %509
    %s512 = sor.u32 256, 48
    %513 = vbcast.lane.b32.xlu0 %v487, %s512
    %v514 = vpop.permute.xlu0 %513
    %s516 = sor.u32 256, 56
    %517 = vbcast.lane.b32.xlu0 %v487, %s516
    %v518 = vpop.permute.xlu0 %517
    %s520 = sor.u32 256, 64
    %521 = vbcast.lane.b32.xlu0 %v487, %s520
    %v522 = vpop.permute.xlu0 %521
    %s524 = sor.u32 256, 72
    %525 = vbcast.lane.b32.xlu0 %v487, %s524
    %v526 = vpop.permute.xlu0 %525
    %s528 = sor.u32 256, 80
    %529 = vbcast.lane.b32.xlu0 %v487, %s528
    %v530 = vpop.permute.xlu0 %529
    %s532 = sor.u32 256, 88
    %533 = vbcast.lane.b32.xlu0 %v487, %s532
    %v534 = vpop.permute.xlu0 %533
    %s536 = sor.u32 256, 96
    %537 = vbcast.lane.b32.xlu0 %v487, %s536
    %v538 = vpop.permute.xlu0 %537
    %s540 = sor.u32 256, 104
    %541 = vbcast.lane.b32.xlu0 %v487, %s540
    %v542 = vpop.permute.xlu0 %541
    %s544 = sor.u32 256, 112
    %545 = vbcast.lane.b32.xlu0 %v487, %s544
    %v546 = vpop.permute.xlu0 %545
    %s548 = sor.u32 256, 120
    %549 = vbcast.lane.b32.xlu0 %v487, %s548
    %v550 = vpop.permute.xlu0 %549
    %v551 = vlaneseq
    %v552 = vshrl.u32 %v551, 7
    %v553 = vsub.s32 3, %v552
    %v554 = vrot.slane %v214, %v553
    %556 = vbcast.lane.b32.xlu0 %v554, 256
    %v557 = vpop.permute.xlu0 %556
    %s559 = sor.u32 256, 8
    %560 = vbcast.lane.b32.xlu0 %v554, %s559
    %v561 = vpop.permute.xlu0 %560
    %s563 = sor.u32 256, 16
    %564 = vbcast.lane.b32.xlu0 %v554, %s563
    %v565 = vpop.permute.xlu0 %564
    %s567 = sor.u32 256, 24
    %568 = vbcast.lane.b32.xlu0 %v554, %s567
    %v569 = vpop.permute.xlu0 %568
    %s571 = sor.u32 256, 32
    %572 = vbcast.lane.b32.xlu0 %v554, %s571
    %v573 = vpop.permute.xlu0 %572
    %s575 = sor.u32 256, 40
    %576 = vbcast.lane.b32.xlu0 %v554, %s575
    %v577 = vpop.permute.xlu0 %576
    %s579 = sor.u32 256, 48
    %580 = vbcast.lane.b32.xlu0 %v554, %s579
    %v581 = vpop.permute.xlu0 %580
    %s583 = sor.u32 256, 56
    %584 = vbcast.lane.b32.xlu0 %v554, %s583
    %v585 = vpop.permute.xlu0 %584
    %s587 = sor.u32 256, 64
    %588 = vbcast.lane.b32.xlu0 %v554, %s587
    %v589 = vpop.permute.xlu0 %588
    %s591 = sor.u32 256, 72
    %592 = vbcast.lane.b32.xlu0 %v554, %s591
    %v593 = vpop.permute.xlu0 %592
    %s595 = sor.u32 256, 80
    %596 = vbcast.lane.b32.xlu0 %v554, %s595
    %v597 = vpop.permute.xlu0 %596
    %s599 = sor.u32 256, 88
    %600 = vbcast.lane.b32.xlu0 %v554, %s599
    %v601 = vpop.permute.xlu0 %600
    %s603 = sor.u32 256, 96
    %604 = vbcast.lane.b32.xlu0 %v554, %s603
    %v605 = vpop.permute.xlu0 %604
    %s607 = sor.u32 256, 104
    %608 = vbcast.lane.b32.xlu0 %v554, %s607
    %v609 = vpop.permute.xlu0 %608
    %s611 = sor.u32 256, 112
    %612 = vbcast.lane.b32.xlu0 %v554, %s611
    %v613 = vpop.permute.xlu0 %612
    %s615 = sor.u32 256, 120
    %616 = vbcast.lane.b32.xlu0 %v554, %s615
    %v617 = vpop.permute.xlu0 %616
    %v618 = vlaneseq
    %v619 = vshrl.u32 %v618, 7
    %v620 = vsub.s32 4, %v619
    %v621 = vrot.slane %v214, %v620
    %623 = vbcast.lane.b32.xlu0 %v621, 256
    %v624 = vpop.permute.xlu0 %623
    %s626 = sor.u32 256, 8
    %627 = vbcast.lane.b32.xlu0 %v621, %s626
    %v628 = vpop.permute.xlu0 %627
    %s630 = sor.u32 256, 16
    %631 = vbcast.lane.b32.xlu0 %v621, %s630
    %v632 = vpop.permute.xlu0 %631
    %s634 = sor.u32 256, 24
    %635 = vbcast.lane.b32.xlu0 %v621, %s634
    %v636 = vpop.permute.xlu0 %635
    %s638 = sor.u32 256, 32
    %639 = vbcast.lane.b32.xlu0 %v621, %s638
    %v640 = vpop.permute.xlu0 %639
    %s642 = sor.u32 256, 40
    %643 = vbcast.lane.b32.xlu0 %v621, %s642
    %v644 = vpop.permute.xlu0 %643
    %s646 = sor.u32 256, 48
    %647 = vbcast.lane.b32.xlu0 %v621, %s646
    %v648 = vpop.permute.xlu0 %647
    %s650 = sor.u32 256, 56
    %651 = vbcast.lane.b32.xlu0 %v621, %s650
    %v652 = vpop.permute.xlu0 %651
    %s654 = sor.u32 256, 64
    %655 = vbcast.lane.b32.xlu0 %v621, %s654
    %v656 = vpop.permute.xlu0 %655
    %s658 = sor.u32 256, 72
    %659 = vbcast.lane.b32.xlu0 %v621, %s658
    %v660 = vpop.permute.xlu0 %659
    %s662 = sor.u32 256, 80
    %663 = vbcast.lane.b32.xlu0 %v621, %s662
    %v664 = vpop.permute.xlu0 %663
    %s666 = sor.u32 256, 88
    %667 = vbcast.lane.b32.xlu0 %v621, %s666
    %v668 = vpop.permute.xlu0 %667
    %s670 = sor.u32 256, 96
    %671 = vbcast.lane.b32.xlu0 %v621, %s670
    %v672 = vpop.permute.xlu0 %671
    %s674 = sor.u32 256, 104
    %675 = vbcast.lane.b32.xlu0 %v621, %s674
    %v676 = vpop.permute.xlu0 %675
    %s678 = sor.u32 256, 112
    %679 = vbcast.lane.b32.xlu0 %v621, %s678
    %v680 = vpop.permute.xlu0 %679
    %s682 = sor.u32 256, 120
    %683 = vbcast.lane.b32.xlu0 %v621, %s682
    %v684 = vpop.permute.xlu0 %683
    %v685 = vlaneseq
    %v686 = vshrl.u32 %v685, 7
    %v687 = vsub.s32 5, %v686
    %v688 = vrot.slane %v214, %v687
    %690 = vbcast.lane.b32.xlu0 %v688, 256
    %v691 = vpop.permute.xlu0 %690
    %s693 = sor.u32 256, 8
    %694 = vbcast.lane.b32.xlu0 %v688, %s693
    %v695 = vpop.permute.xlu0 %694
    %s697 = sor.u32 256, 16
    %698 = vbcast.lane.b32.xlu0 %v688, %s697
    %v699 = vpop.permute.xlu0 %698
    %s701 = sor.u32 256, 24
    %702 = vbcast.lane.b32.xlu0 %v688, %s701
    %v703 = vpop.permute.xlu0 %702
    %s705 = sor.u32 256, 32
    %706 = vbcast.lane.b32.xlu0 %v688, %s705
    %v707 = vpop.permute.xlu0 %706
    %s709 = sor.u32 256, 40
    %710 = vbcast.lane.b32.xlu0 %v688, %s709
    %v711 = vpop.permute.xlu0 %710
    %s713 = sor.u32 256, 48
    %714 = vbcast.lane.b32.xlu0 %v688, %s713
    %v715 = vpop.permute.xlu0 %714
    %s717 = sor.u32 256, 56
    %718 = vbcast.lane.b32.xlu0 %v688, %s717
    %v719 = vpop.permute.xlu0 %718
    %s721 = sor.u32 256, 64
    %722 = vbcast.lane.b32.xlu0 %v688, %s721
    %v723 = vpop.permute.xlu0 %722
    %s725 = sor.u32 256, 72
    %726 = vbcast.lane.b32.xlu0 %v688, %s725
    %v727 = vpop.permute.xlu0 %726
    %s729 = sor.u32 256, 80
    %730 = vbcast.lane.b32.xlu0 %v688, %s729
    %v731 = vpop.permute.xlu0 %730
    %s733 = sor.u32 256, 88
    %734 = vbcast.lane.b32.xlu0 %v688, %s733
    %v735 = vpop.permute.xlu0 %734
    %s737 = sor.u32 256, 96
    %738 = vbcast.lane.b32.xlu0 %v688, %s737
    %v739 = vpop.permute.xlu0 %738
    %s741 = sor.u32 256, 104
    %742 = vbcast.lane.b32.xlu0 %v688, %s741
    %v743 = vpop.permute.xlu0 %742
    %s745 = sor.u32 256, 112
    %746 = vbcast.lane.b32.xlu0 %v688, %s745
    %v747 = vpop.permute.xlu0 %746
    %s749 = sor.u32 256, 120
    %750 = vbcast.lane.b32.xlu0 %v688, %s749
    %v751 = vpop.permute.xlu0 %750
    %v752 = vlaneseq
    %v753 = vshrl.u32 %v752, 7
    %v754 = vsub.s32 6, %v753
    %v755 = vrot.slane %v214, %v754
    %757 = vbcast.lane.b32.xlu0 %v755, 256
    %v758 = vpop.permute.xlu0 %757
    %s760 = sor.u32 256, 8
    %761 = vbcast.lane.b32.xlu0 %v755, %s760
    %v762 = vpop.permute.xlu0 %761
    %s764 = sor.u32 256, 16
    %765 = vbcast.lane.b32.xlu0 %v755, %s764
    %v766 = vpop.permute.xlu0 %765
    %s768 = sor.u32 256, 24
    %769 = vbcast.lane.b32.xlu0 %v755, %s768
    %v770 = vpop.permute.xlu0 %769
    %s772 = sor.u32 256, 32
    %773 = vbcast.lane.b32.xlu0 %v755, %s772
    %v774 = vpop.permute.xlu0 %773
    %s776 = sor.u32 256, 40
    %777 = vbcast.lane.b32.xlu0 %v755, %s776
    %v778 = vpop.permute.xlu0 %777
    %s780 = sor.u32 256, 48
    %781 = vbcast.lane.b32.xlu0 %v755, %s780
    %v782 = vpop.permute.xlu0 %781
    %s784 = sor.u32 256, 56
    %785 = vbcast.lane.b32.xlu0 %v755, %s784
    %v786 = vpop.permute.xlu0 %785
    %s788 = sor.u32 256, 64
    %789 = vbcast.lane.b32.xlu0 %v755, %s788
    %v790 = vpop.permute.xlu0 %789
    %s792 = sor.u32 256, 72
    %793 = vbcast.lane.b32.xlu0 %v755, %s792
    %v794 = vpop.permute.xlu0 %793
    %s796 = sor.u32 256, 80
    %797 = vbcast.lane.b32.xlu0 %v755, %s796
    %v798 = vpop.permute.xlu0 %797
    %s800 = sor.u32 256, 88
    %801 = vbcast.lane.b32.xlu0 %v755, %s800
    %v802 = vpop.permute.xlu0 %801
    %s804 = sor.u32 256, 96
    %805 = vbcast.lane.b32.xlu0 %v755, %s804
    %v806 = vpop.permute.xlu0 %805
    %s808 = sor.u32 256, 104
    %809 = vbcast.lane.b32.xlu0 %v755, %s808
    %v810 = vpop.permute.xlu0 %809
    %s812 = sor.u32 256, 112
    %813 = vbcast.lane.b32.xlu0 %v755, %s812
    %v814 = vpop.permute.xlu0 %813
    %s816 = sor.u32 256, 120
    %817 = vbcast.lane.b32.xlu0 %v755, %s816
    %v818 = vpop.permute.xlu0 %817
    %v819 = vlaneseq
    %v820 = vshrl.u32 %v819, 7
    %v821 = vsub.s32 7, %v820
    %v822 = vrot.slane %v214, %v821
    %824 = vbcast.lane.b32.xlu0 %v822, 256
    %v825 = vpop.permute.xlu0 %824
    %s827 = sor.u32 256, 8
    %828 = vbcast.lane.b32.xlu0 %v822, %s827
    %v829 = vpop.permute.xlu0 %828
    %s831 = sor.u32 256, 16
    %832 = vbcast.lane.b32.xlu0 %v822, %s831
    %v833 = vpop.permute.xlu0 %832
    %s835 = sor.u32 256, 24
    %836 = vbcast.lane.b32.xlu0 %v822, %s835
    %v837 = vpop.permute.xlu0 %836
    %s839 = sor.u32 256, 32
    %840 = vbcast.lane.b32.xlu0 %v822, %s839
    %v841 = vpop.permute.xlu0 %840
    %s843 = sor.u32 256, 40
    %844 = vbcast.lane.b32.xlu0 %v822, %s843
    %v845 = vpop.permute.xlu0 %844
    %s847 = sor.u32 256, 48
    %848 = vbcast.lane.b32.xlu0 %v822, %s847
    %v849 = vpop.permute.xlu0 %848
    %s851 = sor.u32 256, 56
    %852 = vbcast.lane.b32.xlu0 %v822, %s851
    %v853 = vpop.permute.xlu0 %852
    %s855 = sor.u32 256, 64
    %856 = vbcast.lane.b32.xlu0 %v822, %s855
    %v857 = vpop.permute.xlu0 %856
    %s859 = sor.u32 256, 72
    %860 = vbcast.lane.b32.xlu0 %v822, %s859
    %v861 = vpop.permute.xlu0 %860
    %s863 = sor.u32 256, 80
    %864 = vbcast.lane.b32.xlu0 %v822, %s863
    %v865 = vpop.permute.xlu0 %864
    %s867 = sor.u32 256, 88
    %868 = vbcast.lane.b32.xlu0 %v822, %s867
    %v869 = vpop.permute.xlu0 %868
    %s871 = sor.u32 256, 96
    %872 = vbcast.lane.b32.xlu0 %v822, %s871
    %v873 = vpop.permute.xlu0 %872
    %s875 = sor.u32 256, 104
    %876 = vbcast.lane.b32.xlu0 %v822, %s875
    %v877 = vpop.permute.xlu0 %876
    %s879 = sor.u32 256, 112
    %880 = vbcast.lane.b32.xlu0 %v822, %s879
    %v881 = vpop.permute.xlu0 %880
    %s883 = sor.u32 256, 120
    %884 = vbcast.lane.b32.xlu0 %v822, %s883
    %v885 = vpop.permute.xlu0 %884
    %v886 = vmul.f32 %v222, %v356
    %v887 = vmul.f32 %v223, %v360
    %v888 = vmul.f32 %v224, %v364
    %v889 = vmul.f32 %v225, %v368
    %v890 = vmul.f32 %v226, %v372
    %v891 = vmul.f32 %v227, %v376
    %v892 = vmul.f32 %v228, %v380
    %v893 = vmul.f32 %v229, %v384
    %v894 = vmul.f32 %v230, %v388
    %v895 = vmul.f32 %v231, %v392
    %v896 = vmul.f32 %v232, %v396
    %v897 = vmul.f32 %v233, %v400
    %v898 = vmul.f32 %v234, %v404
    %v899 = vmul.f32 %v235, %v408
    %v900 = vmul.f32 %v236, %v412
    %v901 = vmul.f32 %v237, %v416
    %v902 = vmul.f32 %v238, %v423
    %v903 = vmul.f32 %v239, %v427
    %v904 = vmul.f32 %v240, %v431
    %v905 = vmul.f32 %v241, %v435
    %v906 = vmul.f32 %v242, %v439
    %v907 = vmul.f32 %v243, %v443
    %v908 = vmul.f32 %v244, %v447
    %v909 = vmul.f32 %v245, %v451
    %v910 = vmul.f32 %v246, %v455
    %v911 = vmul.f32 %v247, %v459
    %v912 = vmul.f32 %v248, %v463
    %v913 = vmul.f32 %v249, %v467
    %v914 = vmul.f32 %v250, %v471
    %v915 = vmul.f32 %v251, %v475
    %v916 = vmul.f32 %v252, %v479
    %v917 = vmul.f32 %v253, %v483
    %v918 = vmul.f32 %v254, %v490
    %v919 = vmul.f32 %v255, %v494
    %v920 = vmul.f32 %v256, %v498
    %v921 = vmul.f32 %v257, %v502
    %v922 = vmul.f32 %v258, %v506
    %v923 = vmul.f32 %v259, %v510
    %v924 = vmul.f32 %v260, %v514
    %v925 = vmul.f32 %v261, %v518
    %v926 = vmul.f32 %v262, %v522
    %v927 = vmul.f32 %v263, %v526
    %v928 = vmul.f32 %v264, %v530
    %v929 = vmul.f32 %v265, %v534
    %v930 = vmul.f32 %v266, %v538
    %v931 = vmul.f32 %v267, %v542
    %v932 = vmul.f32 %v268, %v546
    %v933 = vmul.f32 %v269, %v550
    %v934 = vmul.f32 %v270, %v557
    %v935 = vmul.f32 %v271, %v561
    %v936 = vmul.f32 %v272, %v565
    %v937 = vmul.f32 %v273, %v569
    %v938 = vmul.f32 %v274, %v573
    %v939 = vmul.f32 %v275, %v577
    %v940 = vmul.f32 %v276, %v581
    %v941 = vmul.f32 %v277, %v585
    %v942 = vmul.f32 %v278, %v589
    %v943 = vmul.f32 %v279, %v593
    %v944 = vmul.f32 %v280, %v597
    %v945 = vmul.f32 %v281, %v601
    %v946 = vmul.f32 %v282, %v605
    %v947 = vmul.f32 %v283, %v609
    %v948 = vmul.f32 %v284, %v613
    %v949 = vmul.f32 %v285, %v617
    %v950 = vmul.f32 %v286, %v624
    %v951 = vmul.f32 %v287, %v628
    %v952 = vmul.f32 %v288, %v632
    %v953 = vmul.f32 %v289, %v636
    %v954 = vmul.f32 %v290, %v640
    %v955 = vmul.f32 %v291, %v644
    %v956 = vmul.f32 %v292, %v648
    %v957 = vmul.f32 %v293, %v652
    %v958 = vmul.f32 %v294, %v656
    %v959 = vmul.f32 %v295, %v660
    %v960 = vmul.f32 %v296, %v664
    %v961 = vmul.f32 %v297, %v668
    %v962 = vmul.f32 %v298, %v672
    %v963 = vmul.f32 %v299, %v676
    %v964 = vmul.f32 %v300, %v680
    %v965 = vmul.f32 %v301, %v684
    %v966 = vmul.f32 %v302, %v691
    %v967 = vmul.f32 %v303, %v695
    %v968 = vmul.f32 %v304, %v699
    %v969 = vmul.f32 %v305, %v703
    %v970 = vmul.f32 %v306, %v707
    %v971 = vmul.f32 %v307, %v711
    %v972 = vmul.f32 %v308, %v715
    %v973 = vmul.f32 %v309, %v719
    %v974 = vmul.f32 %v310, %v723
    %v975 = vmul.f32 %v311, %v727
    %v976 = vmul.f32 %v312, %v731
    %v977 = vmul.f32 %v313, %v735
    %v978 = vmul.f32 %v314, %v739
    %v979 = vmul.f32 %v315, %v743
    %v980 = vmul.f32 %v316, %v747
    %v981 = vmul.f32 %v317, %v751
    %v982 = vmul.f32 %v318, %v758
    %v983 = vmul.f32 %v319, %v762
    %v984 = vmul.f32 %v320, %v766
    %v985 = vmul.f32 %v321, %v770
    %v986 = vmul.f32 %v322, %v774
    %v987 = vmul.f32 %v323, %v778
    %v988 = vmul.f32 %v324, %v782
    %v989 = vmul.f32 %v325, %v786
    %v990 = vmul.f32 %v326, %v790
    %v991 = vmul.f32 %v327, %v794
    %v992 = vmul.f32 %v328, %v798
    %v993 = vmul.f32 %v329, %v802
    %v994 = vmul.f32 %v330, %v806
    %v995 = vmul.f32 %v331, %v810
    %v996 = vmul.f32 %v332, %v814
    %v997 = vmul.f32 %v333, %v818
    %v998 = vmul.f32 %v334, %v825
    %v999 = vmul.f32 %v335, %v829
    %v1000 = vmul.f32 %v336, %v833
    %v1001 = vmul.f32 %v337, %v837
    %v1002 = vmul.f32 %v338, %v841
    %v1003 = vmul.f32 %v339, %v845
    %v1004 = vmul.f32 %v340, %v849
    %v1005 = vmul.f32 %v341, %v853
    %v1006 = vmul.f32 %v342, %v857
    %v1007 = vmul.f32 %v343, %v861
    %v1008 = vmul.f32 %v344, %v865
    %v1009 = vmul.f32 %v345, %v869
    %v1010 = vmul.f32 %v346, %v873
    %v1011 = vmul.f32 %v347, %v877
    %v1012 = vmul.f32 %v348, %v881
    %v1013 = vmul.f32 %v349, %v885
    %v1014 = vadd.f32 %v886, %v887
    %v1015 = vadd.f32 %v1014, %v888
    %v1016 = vadd.f32 %v1015, %v889
    %v1017 = vadd.f32 %v1016, %v890
    %v1018 = vadd.f32 %v1017, %v891
    %v1019 = vadd.f32 %v1018, %v892
    %v1020 = vadd.f32 %v1019, %v893
    %v1021 = vadd.f32 %v1020, %v894
    %v1022 = vadd.f32 %v1021, %v895
    %v1023 = vadd.f32 %v1022, %v896
    %v1024 = vadd.f32 %v1023, %v897
    %v1025 = vadd.f32 %v1024, %v898
    %v1026 = vadd.f32 %v1025, %v899
    %v1027 = vadd.f32 %v1026, %v900
    %v1028 = vadd.f32 %v1027, %v901
    %v1029 = vrot.slane %v1028, 4
    %v1030 = vadd.f32 %v1028, %v1029
    %v1031 = vrot.slane %v1030, 2
    %v1032 = vadd.f32 %v1030, %v1031
    %v1033 = vrot.slane %v1032, 1
    %v1034 = vadd.f32 %v1032, %v1033
    %v1035 = vadd.f32 %v902, %v903
    %v1036 = vadd.f32 %v1035, %v904
    %v1037 = vadd.f32 %v1036, %v905
    %v1038 = vadd.f32 %v1037, %v906
    %v1039 = vadd.f32 %v1038, %v907
    %v1040 = vadd.f32 %v1039, %v908
    %v1041 = vadd.f32 %v1040, %v909
    %v1042 = vadd.f32 %v1041, %v910
    %v1043 = vadd.f32 %v1042, %v911
    %v1044 = vadd.f32 %v1043, %v912
    %v1045 = vadd.f32 %v1044, %v913
    %v1046 = vadd.f32 %v1045, %v914
    %v1047 = vadd.f32 %v1046, %v915
    %v1048 = vadd.f32 %v1047, %v916
    %v1049 = vadd.f32 %v1048, %v917
    %v1050 = vrot.slane %v1049, 4
    %v1051 = vadd.f32 %v1049, %v1050
    %v1052 = vrot.slane %v1051, 2
    %v1053 = vadd.f32 %v1051, %v1052
    %v1054 = vrot.slane %v1053, 1
    %v1055 = vadd.f32 %v1053, %v1054
    %v1056 = vadd.f32 %v918, %v919
    %v1057 = vadd.f32 %v1056, %v920
    %v1058 = vadd.f32 %v1057, %v921
    %v1059 = vadd.f32 %v1058, %v922
    %v1060 = vadd.f32 %v1059, %v923
    %v1061 = vadd.f32 %v1060, %v924
    %v1062 = vadd.f32 %v1061, %v925
    %v1063 = vadd.f32 %v1062, %v926
    %v1064 = vadd.f32 %v1063, %v927
    %v1065 = vadd.f32 %v1064, %v928
    %v1066 = vadd.f32 %v1065, %v929
    %v1067 = vadd.f32 %v1066, %v930
    %v1068 = vadd.f32 %v1067, %v931
    %v1069 = vadd.f32 %v1068, %v932
    %v1070 = vadd.f32 %v1069, %v933
    %v1071 = vrot.slane %v1070, 4
    %v1072 = vadd.f32 %v1070, %v1071
    %v1073 = vrot.slane %v1072, 2
    %v1074 = vadd.f32 %v1072, %v1073
    %v1075 = vrot.slane %v1074, 1
    %v1076 = vadd.f32 %v1074, %v1075
    %v1077 = vadd.f32 %v934, %v935
    %v1078 = vadd.f32 %v1077, %v936
    %v1079 = vadd.f32 %v1078, %v937
    %v1080 = vadd.f32 %v1079, %v938
    %v1081 = vadd.f32 %v1080, %v939
    %v1082 = vadd.f32 %v1081, %v940
    %v1083 = vadd.f32 %v1082, %v941
    %v1084 = vadd.f32 %v1083, %v942
    %v1085 = vadd.f32 %v1084, %v943
    %v1086 = vadd.f32 %v1085, %v944
    %v1087 = vadd.f32 %v1086, %v945
    %v1088 = vadd.f32 %v1087, %v946
    %v1089 = vadd.f32 %v1088, %v947
    %v1090 = vadd.f32 %v1089, %v948
    %v1091 = vadd.f32 %v1090, %v949
    %v1092 = vrot.slane %v1091, 4
    %v1093 = vadd.f32 %v1091, %v1092
    %v1094 = vrot.slane %v1093, 2
    %v1095 = vadd.f32 %v1093, %v1094
    %v1096 = vrot.slane %v1095, 1
    %v1097 = vadd.f32 %v1095, %v1096
    %v1098 = vadd.f32 %v950, %v951
    %v1099 = vadd.f32 %v1098, %v952
    %v1100 = vadd.f32 %v1099, %v953
    %v1101 = vadd.f32 %v1100, %v954
    %v1102 = vadd.f32 %v1101, %v955
    %v1103 = vadd.f32 %v1102, %v956
    %v1104 = vadd.f32 %v1103, %v957
    %v1105 = vadd.f32 %v1104, %v958
    %v1106 = vadd.f32 %v1105, %v959
    %v1107 = vadd.f32 %v1106, %v960
    %v1108 = vadd.f32 %v1107, %v961
    %v1109 = vadd.f32 %v1108, %v962
    %v1110 = vadd.f32 %v1109, %v963
    %v1111 = vadd.f32 %v1110, %v964
    %v1112 = vadd.f32 %v1111, %v965
    %v1113 = vrot.slane %v1112, 4
    %v1114 = vadd.f32 %v1112, %v1113
    %v1115 = vrot.slane %v1114, 2
    %v1116 = vadd.f32 %v1114, %v1115
    %v1117 = vrot.slane %v1116, 1
    %v1118 = vadd.f32 %v1116, %v1117
    %v1119 = vadd.f32 %v966, %v967
    %v1120 = vadd.f32 %v1119, %v968
    %v1121 = vadd.f32 %v1120, %v969
    %v1122 = vadd.f32 %v1121, %v970
    %v1123 = vadd.f32 %v1122, %v971
    %v1124 = vadd.f32 %v1123, %v972
    %v1125 = vadd.f32 %v1124, %v973
    %v1126 = vadd.f32 %v1125, %v974
    %v1127 = vadd.f32 %v1126, %v975
    %v1128 = vadd.f32 %v1127, %v976
    %v1129 = vadd.f32 %v1128, %v977
    %v1130 = vadd.f32 %v1129, %v978
    %v1131 = vadd.f32 %v1130, %v979
    %v1132 = vadd.f32 %v1131, %v980
    %v1133 = vadd.f32 %v1132, %v981
    %v1134 = vrot.slane %v1133, 4
    %v1135 = vadd.f32 %v1133, %v1134
    %v1136 = vrot.slane %v1135, 2
    %v1137 = vadd.f32 %v1135, %v1136
    %v1138 = vrot.slane %v1137, 1
    %v1139 = vadd.f32 %v1137, %v1138
    %v1140 = vadd.f32 %v982, %v983
    %v1141 = vadd.f32 %v1140, %v984
    %v1142 = vadd.f32 %v1141, %v985
    %v1143 = vadd.f32 %v1142, %v986
    %v1144 = vadd.f32 %v1143, %v987
    %v1145 = vadd.f32 %v1144, %v988
    %v1146 = vadd.f32 %v1145, %v989
    %v1147 = vadd.f32 %v1146, %v990
    %v1148 = vadd.f32 %v1147, %v991
    %v1149 = vadd.f32 %v1148, %v992
    %v1150 = vadd.f32 %v1149, %v993
    %v1151 = vadd.f32 %v1150, %v994
    %v1152 = vadd.f32 %v1151, %v995
    %v1153 = vadd.f32 %v1152, %v996
    %v1154 = vadd.f32 %v1153, %v997
    %v1155 = vrot.slane %v1154, 4
    %v1156 = vadd.f32 %v1154, %v1155
    %v1157 = vrot.slane %v1156, 2
    %v1158 = vadd.f32 %v1156, %v1157
    %v1159 = vrot.slane %v1158, 1
    %v1160 = vadd.f32 %v1158, %v1159
    %v1161 = vadd.f32 %v998, %v999
    %v1162 = vadd.f32 %v1161, %v1000
    %v1163 = vadd.f32 %v1162, %v1001
    %v1164 = vadd.f32 %v1163, %v1002
    %v1165 = vadd.f32 %v1164, %v1003
    %v1166 = vadd.f32 %v1165, %v1004
    %v1167 = vadd.f32 %v1166, %v1005
    %v1168 = vadd.f32 %v1167, %v1006
    %v1169 = vadd.f32 %v1168, %v1007
    %v1170 = vadd.f32 %v1169, %v1008
    %v1171 = vadd.f32 %v1170, %v1009
    %v1172 = vadd.f32 %v1171, %v1010
    %v1173 = vadd.f32 %v1172, %v1011
    %v1174 = vadd.f32 %v1173, %v1012
    %v1175 = vadd.f32 %v1174, %v1013
    %v1176 = vrot.slane %v1175, 4
    %v1177 = vadd.f32 %v1175, %v1176
    %v1178 = vrot.slane %v1177, 2
    %v1179 = vadd.f32 %v1177, %v1178
    %v1180 = vrot.slane %v1179, 1
    %v1181 = vadd.f32 %v1179, %v1180
    %v1182 = vld [vmem:[#allocation4] sm:$0xff]
    %1184 = vset.pattern.permute.xlu0 0
    %1185 = vperm.xlu0 %1184, %v206
    %v1186 = vpop.permute.xlu0 %1185
    %v1188 = vmul.f32 %v1186, %v1182
    %vm1197 = vcmask 1041409
    %v1198 = vsel %vm1197, %v1055, %v1034
    %vm1199 = vcmask 1042434
    %v1200 = vsel %vm1199, %v1076, %v1198
    %vm1201 = vcmask 1043459
    %v1202 = vsel %vm1201, %v1097, %v1200
    %vm1203 = vcmask 1044484
    %v1204 = vsel %vm1203, %v1118, %v1202
    %vm1205 = vcmask 1045509
    %v1206 = vsel %vm1205, %v1139, %v1204
    %vm1207 = vcmask 1046534
    %v1208 = vsel %vm1207, %v1160, %v1206
    %vm1209 = vcmask 1047559
    %v1210 = vsel %vm1209, %v1181, %v1208
    %v1212 = vadd.f32 %v1188, %v1210
    %1213 = vst [vmem:[#allocation4] sm:$0xff] %v1212
    %1214 = vst.msk [vmem:[#allocation2] sm:$0xff] %vm220, %v203
    // Predicated region
    $region54: #{tpu_custom_call.1} parent=1 // pred_check
      %p1215 = pneg %p93
    $region55: #{tpu_custom_call.1} parent=1 // pred_check_branch
      %1217 = sbr.rel (%p1215) target = $region57
    $region56: #{tpu_custom_call.1} parent=1 // pred_region
      %v1218 = vld [vmem:[#allocation4] sm:$0xff]
      %v1219 = vld [vmem:[#allocation3] sm:$0xff]
      %1221 = vset.pattern.permute.xlu0 0
      %1222 = vperm.xlu0 %1221, %v1219
      %v1223 = vpop.permute.xlu0 %1222
      %v1225 = vrcp.pop %v1223
      %v1226 = vmul.f32 %v1218, %v1225
      %v1227 = vld [vmem:[#allocation11] sm:$0xff]
      %v1228 = vld [vmem:[#allocation11 + $0x8] sm:$0xff]
      %v1229 = vld [vmem:[#allocation11 + $0x10] sm:$0xff]
      %v1230 = vld [vmem:[#allocation11 + $0x18] sm:$0xff]
      %v1231 = vld [vmem:[#allocation11 + $0x20] sm:$0xff]
      %v1232 = vld [vmem:[#allocation11 + $0x28] sm:$0xff]
      %v1233 = vld [vmem:[#allocation11 + $0x30] sm:$0xff]
      %v1234 = vld [vmem:[#allocation11 + $0x38] sm:$0xff]
      %v1235 = vld [vmem:[#allocation11 + $0x40] sm:$0xff]
      %v1236 = vld [vmem:[#allocation11 + $0x48] sm:$0xff]
      %v1237 = vld [vmem:[#allocation11 + $0x50] sm:$0xff]
      %v1238 = vld [vmem:[#allocation11 + $0x58] sm:$0xff]
      %v1239 = vld [vmem:[#allocation11 + $0x60] sm:$0xff]
      %v1240 = vld [vmem:[#allocation11 + $0x68] sm:$0xff]
      %v1241 = vld [vmem:[#allocation11 + $0x70] sm:$0xff]
      %v1242 = vld [vmem:[#allocation11 + $0x78] sm:$0xff]
      %v1243 = vld [vmem:[#allocation13] sm:$0xff]
      %v1244 = vld [vmem:[#allocation13 + $0x8] sm:$0xff]
      %v1245 = vld [vmem:[#allocation13 + $0x10] sm:$0xff]
      %v1246 = vld [vmem:[#allocation13 + $0x18] sm:$0xff]
      %v1247 = vld [vmem:[#allocation13 + $0x20] sm:$0xff]
      %v1248 = vld [vmem:[#allocation13 + $0x28] sm:$0xff]
      %v1249 = vld [vmem:[#allocation13 + $0x30] sm:$0xff]
      %v1250 = vld [vmem:[#allocation13 + $0x38] sm:$0xff]
      %v1251 = vld [vmem:[#allocation13 + $0x40] sm:$0xff]
      %v1252 = vld [vmem:[#allocation13 + $0x48] sm:$0xff]
      %v1253 = vld [vmem:[#allocation13 + $0x50] sm:$0xff]
      %v1254 = vld [vmem:[#allocation13 + $0x58] sm:$0xff]
      %v1255 = vld [vmem:[#allocation13 + $0x60] sm:$0xff]
      %v1256 = vld [vmem:[#allocation13 + $0x68] sm:$0xff]
      %v1257 = vld [vmem:[#allocation13 + $0x70] sm:$0xff]
      %v1258 = vld [vmem:[#allocation13 + $0x78] sm:$0xff]
      %1259 = vmatprep.subr.mxu0 0.0
      %1260 = vmatpush1.msra.mxu0 %v1258
      %1261 = vmatprep.subr.mxu0 0.0
      %1262 = vmatpush1.msra.mxu0 %v1257
      %1263 = vmatprep.subr.mxu0 0.0
      %1264 = vmatpush1.msra.mxu0 %v1256
      %1265 = vmatprep.subr.mxu0 0.0
      %1266 = vmatpush1.msra.mxu0 %v1255
      %1267 = vmatprep.subr.mxu0 0.0
      %1268 = vmatpush1.msra.mxu0 %v1254
      %1269 = vmatprep.subr.mxu0 0.0
      %1270 = vmatpush1.msra.mxu0 %v1253
      %1271 = vmatprep.subr.mxu0 0.0
      %1272 = vmatpush1.msra.mxu0 %v1252
      %1273 = vmatprep.subr.mxu0 0.0
      %1274 = vmatpush1.msra.mxu0 %v1251
      %1275 = vmatprep.subr.mxu0 0.0
      %1276 = vmatpush1.msra.mxu0 %v1250
      %1277 = vmatprep.subr.mxu0 0.0
      %1278 = vmatpush1.msra.mxu0 %v1249
      %1279 = vmatprep.subr.mxu0 0.0
      %1280 = vmatpush1.msra.mxu0 %v1248
      %1281 = vmatprep.subr.mxu0 0.0
      %1282 = vmatpush1.msra.mxu0 %v1247
      %1283 = vmatprep.subr.mxu0 0.0
      %1284 = vmatpush1.msra.mxu0 %v1246
      %1285 = vmatprep.subr.mxu0 0.0
      %1286 = vmatpush1.msra.mxu0 %v1245
      %1287 = vmatprep.subr.mxu0 0.0
      %1288 = vmatpush1.msra.mxu0 %v1244
      %1289 = vmatprep.subr.mxu0 0.0
      %1290 = vmatpush1.msra.mxu0 %v1243
      %1291 = vmatprep.subr.mxu0 0.0
      %1292 = vmatpush2.msra.mxu0 0.0
      %1293 = vmatprep.subr.mxu0 0.0
      %1294 = vmatpush2.msra.mxu0 0.0
      %1295 = vmatprep.subr.mxu0 0.0
      %1296 = vmatpush2.msra.mxu0 0.0
      %1297 = vmatprep.subr.mxu0 0.0
      %1298 = vmatpush2.msra.mxu0 0.0
      %1299 = vmatprep.subr.mxu0 0.0
      %1300 = vmatpush2.msra.mxu0 0.0
      %1301 = vmatprep.subr.mxu0 0.0
      %1302 = vmatpush2.msra.mxu0 0.0
      %1303 = vmatprep.subr.mxu0 0.0
      %1304 = vmatpush2.msra.mxu0 0.0
      %1305 = vmatprep.subr.mxu0 0.0
      %1306 = vmatpush2.msra.mxu0 0.0
      %1307 = vmatprep.subr.mxu0 0.0
      %1308 = vmatpush2.msra.mxu0 0.0
      %1309 = vmatprep.subr.mxu0 0.0
      %1310 = vmatpush2.msra.mxu0 0.0
      %1311 = vmatprep.subr.mxu0 0.0
      %1312 = vmatpush2.msra.mxu0 0.0
      %1313 = vmatprep.subr.mxu0 0.0
      %1314 = vmatpush2.msra.mxu0 0.0
      %1315 = vmatprep.subr.mxu0 0.0
      %1316 = vmatpush2.msra.mxu0 0.0
      %1317 = vmatprep.subr.mxu0 0.0
      %1318 = vmatpush2.msra.mxu0 0.0
      %1319 = vmatprep.subr.mxu0 0.0
      %1320 = vmatpush2.msra.mxu0 0.0
      %1321 = vmatprep.subr.mxu0 0.0
      %1322 = vmatpush2.msra.mxu0 0.0
      %1323 = vmatprep.mubr.f32.mxu0 0.0
      %1324 = vmatmul.mubr.f32.gmra.mxu0 %v1226
      %v1325 = vpop.f32.mrf.mxu0
      %v1326 = vadd.f32 0.0, %v1325
      %v1327 = vpop.f32.mrf.mxu0
      %1328 = vdwg.mxu0
      %1329 = vmatprep.subr.mxu0 0.0
      %1330 = vmatpush1.msra.mxu0 %v1242
      %1331 = vmatprep.subr.mxu0 0.0
      %1332 = vmatpush1.msra.mxu0 %v1241
      %1333 = vmatprep.subr.mxu0 0.0
      %1334 = vmatpush1.msra.mxu0 %v1240
      %1335 = vmatprep.subr.mxu0 0.0
      %1336 = vmatpush1.msra.mxu0 %v1239
      %1337 = vmatprep.subr.mxu0 0.0
      %1338 = vmatpush1.msra.mxu0 %v1238
      %1339 = vmatprep.subr.mxu0 0.0
      %1340 = vmatpush1.msra.mxu0 %v1237
      %1341 = vmatprep.subr.mxu0 0.0
      %1342 = vmatpush1.msra.mxu0 %v1236
      %1343 = vmatprep.subr.mxu0 0.0
      %1344 = vmatpush1.msra.mxu0 %v1235
      %1345 = vmatprep.subr.mxu0 0.0
      %1346 = vmatpush1.msra.mxu0 %v1234
      %1347 = vmatprep.subr.mxu0 0.0
      %1348 = vmatpush1.msra.mxu0 %v1233
      %1349 = vmatprep.subr.mxu0 0.0
      %1350 = vmatpush1.msra.mxu0 %v1232
      %1351 = vmatprep.subr.mxu0 0.0
      %1352 = vmatpush1.msra.mxu0 %v1231
      %1353 = vmatprep.subr.mxu0 0.0
      %1354 = vmatpush1.msra.mxu0 %v1230
      %1355 = vmatprep.subr.mxu0 0.0
      %1356 = vmatpush1.msra.mxu0 %v1229
      %1357 = vmatprep.subr.mxu0 0.0
      %1358 = vmatpush1.msra.mxu0 %v1228
      %1359 = vmatprep.subr.mxu0 0.0
      %1360 = vmatpush1.msra.mxu0 %v1227
      %1361 = vmatprep.subr.mxu0 0.0
      %1362 = vmatpush2.msra.mxu0 0.0
      %1363 = vmatprep.subr.mxu0 0.0
      %1364 = vmatpush2.msra.mxu0 0.0
      %1365 = vmatprep.subr.mxu0 0.0
      %1366 = vmatpush2.msra.mxu0 0.0
      %1367 = vmatprep.subr.mxu0 0.0
      %1368 = vmatpush2.msra.mxu0 0.0
      %1369 = vmatprep.subr.mxu0 0.0
      %1370 = vmatpush2.msra.mxu0 0.0
      %1371 = vmatprep.subr.mxu0 0.0
      %1372 = vmatpush2.msra.mxu0 0.0
      %1373 = vmatprep.subr.mxu0 0.0
      %1374 = vmatpush2.msra.mxu0 0.0
      %1375 = vmatprep.subr.mxu0 0.0
      %1376 = vmatpush2.msra.mxu0 0.0
      %1377 = vmatprep.subr.mxu0 0.0
      %1378 = vmatpush2.msra.mxu0 0.0
      %1379 = vmatprep.subr.mxu0 0.0
      %1380 = vmatpush2.msra.mxu0 0.0
      %1381 = vmatprep.subr.mxu0 0.0
      %1382 = vmatpush2.msra.mxu0 0.0
      %1383 = vmatprep.subr.mxu0 0.0
      %1384 = vmatpush2.msra.mxu0 0.0
      %1385 = vmatprep.subr.mxu0 0.0
      %1386 = vmatpush2.msra.mxu0 0.0
      %1387 = vmatprep.subr.mxu0 0.0
      %1388 = vmatpush2.msra.mxu0 0.0
      %1389 = vmatprep.subr.mxu0 0.0
      %1390 = vmatpush2.msra.mxu0 0.0
      %1391 = vmatprep.subr.mxu0 0.0
      %1392 = vmatpush2.msra.mxu0 0.0
      %1393 = vmatprep.mubr.f32.mxu0 0.0
      %1394 = vmatmul.mubr.f32.gmra.mxu0 %v101
      %v1395 = vpop.f32.mrf.mxu0
      %v1396 = vadd.f32 %v1326, %v1395
      %v1397 = vpop.f32.mrf.mxu0
      %1398 = vdwg.mxu0
      %v1399 = vld [vmem:[%s6] sm:$0x1]
      %v1401 = vlaneseq
      %v1402 = vshrl.u32 %v1401, 7
      %v1403 = vsub.s32 0, %v1402
      %v1404 = vrot.slane %v1399, %v1403
      %v1406 = vadd.f32 %v1396, %v1404
      %v1407 = vtanh.pop %v1406
      %1408 = vst [vmem:[#allocation14] sm:$0xff] %v1407
    $region57: #{tpu_custom_call.1} parent=1 // pred_fallthru
      _
    // Predicated region
    $region58: #{tpu_custom_call.1} parent=1 // pred_check
      _
    $region59: #{tpu_custom_call.1} parent=1 // pred_check_branch
      %1410 = sbr.rel (0) target = $region61
    $region60: #{tpu_custom_call.1} parent=1 // pred_region
      %s1412 = ssub.s32 128, 128
      %1413 = vsyncadd [#allocation7], %s1412
      %s1415 = sshll.u32 [#allocation14], 4
      %s1416 = int_to_ptr.vmem [resolvable:$true] %s1415
      %1418 = dma.vmem_to_hbm [thread:$0]  %s1416, 128, %s7, [#allocation7]
    $region61: #{tpu_custom_call.1} parent=1 // pred_fallthru
      _
    // Predicated region
    $region62: #{tpu_custom_call.1} parent=1 // pred_check
      _
    $region63: #{tpu_custom_call.1} parent=1 // pred_check_branch
      %1420 = sbr.rel (0) target = $region65
    $region64: #{tpu_custom_call.1} parent=1 // pred_region
      %1421 = dma.done [#allocation7], 128
    $region65: #{tpu_custom_call.1} parent=1 // pred_fallthru
      _
    %1422 = vsyncpa [#allocation6], 1
    %1423 = vsyncpa [#allocation9], 1
    %1424 = vsyncpa [#allocation12], 1
    %1425 = vsyncpa [#allocation7], 1

</llo_original>
